<compile_context>
chip_gen: v7x
topology: tpu7x:2x2x1
jax: 0.10.0
libtpu: 0.0.40
codegen_flags: <defaults>
</compile_context>

<pallas_src>
import math

import numpy as np

import jax
import jax.numpy as jnp
from jax.experimental import pallas as pl
from jax.experimental.pallas import tpu as pltpu

# ----------------------------- model sizes --------------------------------
BATCH = 2
SEQ = 8
DIM_MODEL = 32
NUM_HEADS = 4
DIM_K = max(DIM_MODEL // NUM_HEADS, 1)      # per-head q/k/v dim = 8
DIM_FF = 64
LN_EPS = 1e-5

BS = BATCH * SEQ                            # rows processed per call = 16
QKV_W = 3 * DIM_K                           # per-head fused [q|k|v] width = 24

# --- attention weight slab: (H, ATTN_ROWS, ATTN_COLS) bf16 ------------------
#   rows 0:32, cols   0:24  -> [Wq/sqrt(dk) | Wk | Wv]  (per head)
#   row  32,   cols   0:24  -> [bq/sqrt(dk) | bk | bv]  (hit by x_aug ones col)
#   rows 0:8,  cols 128:160 -> Wo[h*dk:(h+1)*dk, :]     (128-lane aligned)
ATTN_ROWS = 40                              # D + 1 bias row, padded to 8-multiple
ONES_COL = DIM_MODEL                        # x_aug column that is constant 1.0
W_O_COL = 128
ATTN_COLS = 256

# --- feed-forward weight slab: (FF_ROWS, FF_COLS) bf16 ----------------------
#   rows 0:32, cols   0:64  -> W1 (D, FF)
#   rows 0:64, cols 128:160 -> W2 (FF, D)   un-transposed, 128-lane aligned
FF_ROWS = 64
W_1_COL = 0
W_2_COL = 128
FF_COLS = 256

# --- bias / layernorm / mask slab: (BIAS_ROWS, 128) f32 ---------------------
BIAS_ROWS = 24
BIAS_COLS = 128
B_O_ROW, B_1_ROW, B_2_ROW = 0, 1, 2
G_1_ROW, BE_1_ROW, G_2_ROW, BE_2_ROW = 3, 4, 5, 6
MASK_ROW = 8                                # rows 8:24 hold the (16,16) additive mask


# ----------------------------- Pallas kernel --------------------------------
def encoder_layer_kernel(x_ref, wa_ref, wf_ref, b_ref, out_ref):
    """x_ref: (BS, ATTN_ROWS) f32 augmented input (col 32 == 1, cols 33:40 == 0)
       wa_ref: (H, ATTN_ROWS, ATTN_COLS) bf16 attention slab
       wf_ref: (FF_ROWS, FF_COLS) bf16 feed-forward slab
       b_ref:  (BIAS_ROWS, 128) f32 bias / LN / mask slab."""
    x_aug = x_ref[...]                                   # (16, 40) f32
    x = x_aug[:, 0:DIM_MODEL]                            # (16, 32) f32 residual path
    x_bf = x_aug.astype(jnp.bfloat16)                    # bf16 MXU operand

    # ---- weight views (bf16, 128-lane-aligned starts) ----------------------
    w_qkv = wa_ref[:, :, 0:QKV_W]                        # (H, 40, 24)
    w_o = wa_ref[:, 0:DIM_K, W_O_COL:W_O_COL + DIM_MODEL]        # (H, 8, 32)
    w_1 = wf_ref[0:DIM_MODEL, W_1_COL:W_1_COL + DIM_FF]          # (32, 64)
    w_2 = wf_ref[0:DIM_FF, W_2_COL:W_2_COL + DIM_MODEL]          # (64, 32)

    # ---- bias / LN / mask views (f32), read once ----------------------------
    b_o = b_ref[B_O_ROW:B_O_ROW + 1, 0:DIM_MODEL]
    b_1 = b_ref[B_1_ROW:B_1_ROW + 1, 0:DIM_FF]
    b_2 = b_ref[B_2_ROW:B_2_ROW + 1, 0:DIM_MODEL]
    g_1 = b_ref[G_1_ROW:G_1_ROW + 1, 0:DIM_MODEL]
    be_1 = b_ref[BE_1_ROW:BE_1_ROW + 1, 0:DIM_MODEL]
    g_2 = b_ref[G_2_ROW:G_2_ROW + 1, 0:DIM_MODEL]
    be_2 = b_ref[BE_2_ROW:BE_2_ROW + 1, 0:DIM_MODEL]
    mask = b_ref[MASK_ROW:MASK_ROW + BS, 0:BS]           # (16, 16) additive 0 / -1e30

    # ---- batched per-head QKV projection ------------------------------------
    # scale 1/sqrt(dk) and the q/k/v biases are folded into the slab; the
    # ones column of x_aug turns the bias row into a plain matmul contribution.
    xh = jnp.broadcast_to(x_bf, (NUM_HEADS, BS, ATTN_ROWS))      # (4, 16, 40)
    qkv = jax.lax.dot_general(xh, w_qkv, (((2,), (1,)), ((0,), (0,))),
                              preferred_element_type=jnp.float32)  # (4, 16, 24)
    q = qkv[:, :, 0:DIM_K].astype(jnp.bfloat16)
    k = qkv[:, :, DIM_K:2 * DIM_K].astype(jnp.bfloat16)
    v = qkv[:, :, 2 * DIM_K:3 * DIM_K].astype(jnp.bfloat16)

    # ---- single batched masked-softmax chain over all heads -----------------
    s = jax.lax.dot_general(q, k, (((2,), (2,)), ((0,), (0,))),
                            preferred_element_type=jnp.float32)    # (4, 16, 16)
    s = s + mask                                          # block-diag batch mask
    m = jnp.max(s, axis=-1, keepdims=True)
    p = jnp.exp(s - m)
    p = p * pl.reciprocal(jnp.sum(p, axis=-1, keepdims=True), approx=True)

    ctx = jax.lax.dot_general(p.astype(jnp.bfloat16), v,
                              (((2,), (1,)), ((0,), (0,))),
                              preferred_element_type=jnp.float32)   # (4, 16, 8)

    # concat_h(ctx_h) @ Wo  ==  sum_h ctx_h @ Wo[h]  (batched out-proj + head sum)
    ctx_o = jax.lax.dot_general(ctx.astype(jnp.bfloat16), w_o,
                                (((2,), (1,)), ((0,), (0,))),
                                preferred_element_type=jnp.float32)  # (4, 16, 32)
    attn = b_o
    for h in range(NUM_HEADS):        # static unroll: plain vreg adds, no XLU
        attn = attn + ctx_o[h]

    # ---- residual + layernorm 1 (f32) ---------------------------------------
    y = x + attn
    mu = jnp.mean(y, axis=-1, keepdims=True)
    var = jnp.mean((y - mu) * (y - mu), axis=-1, keepdims=True)
    y = (y - mu) * jax.lax.rsqrt(var + LN_EPS) * g_1 + be_1

    # ---- feed forward: Linear -> ReLU -> Linear (bf16 MXU, f32 accumulate) ---
    hdn = jnp.dot(y.astype(jnp.bfloat16), w_1,
                  preferred_element_type=jnp.float32) + b_1
    hdn = jnp.maximum(hdn, 0.0)
    ff = jnp.dot(hdn.astype(jnp.bfloat16), w_2,
                 preferred_element_type=jnp.float32) + b_2

    # ---- residual + layernorm 2 ----------------------------------------------
    z = y + ff
    mu2 = jnp.mean(z, axis=-1, keepdims=True)
    var2 = jnp.mean((z - mu2) * (z - mu2), axis=-1, keepdims=True)
    out_ref[...] = (z - mu2) * jax.lax.rsqrt(var2 + LN_EPS) * g_2 + be_2


# ----------------------------- wrapper --------------------------------------
def transformer_encoder_layer(x, wa_slab, wf_slab, b_slab):
    """x: (B, S, D) float32 -> (B, S, D) float32."""
    B, S, D = x.shape
    assert (B, S, D) == (BATCH, SEQ, DIM_MODEL), "kernel compiled for fixed sizes"

    # augmented input [x | 1 | 0-pad]: the ones column applies the qkv biases
    # inside the fused projection matmul (pure XLA layout plumbing).
    x2 = x.reshape(BS, D)
    x_aug = jnp.concatenate(
        [x2, jnp.ones((BS, 1), x.dtype),
         jnp.zeros((BS, ATTN_ROWS - D - 1), x.dtype)], axis=1)       # (16, 40)

    flops = (2 * NUM_HEADS * BS * ATTN_ROWS * QKV_W          # batched QKV proj
             + 2 * NUM_HEADS * BS * BS * DIM_K * 2            # scores + ctx
             + 2 * NUM_HEADS * BS * DIM_K * DIM_MODEL         # out projection
             + 4 * BS * DIM_MODEL * DIM_FF)                   # two FF matmuls
    cost = pl.CostEstimate(
        flops=flops,
        transcendentals=NUM_HEADS * BS * BS + 3 * BS,         # softmax exps + rsqrt/recip
        bytes_accessed=(4 * BS * ATTN_ROWS                    # x_aug (f32)
                        + 2 * NUM_HEADS * ATTN_ROWS * ATTN_COLS   # attn slab (bf16)
                        + 2 * FF_ROWS * FF_COLS                   # ff slab (bf16)
                        + 4 * BIAS_ROWS * BIAS_COLS               # bias slab (f32)
                        + 4 * BS * DIM_MODEL))                    # output

    fn = pl.pallas_call(
        encoder_layer_kernel,
        out_shape=jax.ShapeDtypeStruct((BS, DIM_MODEL), jnp.float32),
        in_specs=[pl.BlockSpec(memory_space=pltpu.MemorySpace.VMEM)] * 4,
        out_specs=pl.BlockSpec(memory_space=pltpu.MemorySpace.VMEM),
        cost_estimate=cost,
    )
    # whole problem in one grid-less invocation: one DMA per operand, no
    # serial-grid overhead.  (Only worth adding a "parallel" grid axis for
    # v7x's 2 TensorCores once batch/seq grow well beyond these toy sizes.)
    return fn(x_aug, wa_slab, wf_slab, b_slab).reshape(B, S, D)


# ----------------------------- param init & packing -------------------------
def init_params(key):
    ks = jax.random.split(key, 12)
    s = 0.05
    return {
        # per-head projections, stored (H, D_in, D_out) so y = x @ W + b
        "wq": s * jax.random.normal(ks[0], (NUM_HEADS, DIM_MODEL, DIM_K), jnp.float32),
        "bq": s * jax.random.normal(ks[1], (NUM_HEADS, 1, DIM_K), jnp.float32),
        "wk": s * jax.random.normal(ks[2], (NUM_HEADS, DIM_MODEL, DIM_K), jnp.float32),
        "bk": s * jax.random.normal(ks[3], (NUM_HEADS, 1, DIM_K), jnp.float32),
        "wv": s * jax.random.normal(ks[4], (NUM_HEADS, DIM_MODEL, DIM_K), jnp.float32),
        "bv": s * jax.random.normal(ks[5], (NUM_HEADS, 1, DIM_K), jnp.float32),
        "wo": s * jax.random.normal(ks[6], (NUM_HEADS * DIM_K, DIM_MODEL), jnp.float32),
        "bo": s * jax.random.normal(ks[7], (1, DIM_MODEL), jnp.float32),
        "g1": jnp.ones((1, DIM_MODEL), jnp.float32),
        "be1": jnp.zeros((1, DIM_MODEL), jnp.float32),
        "w1": s * jax.random.normal(ks[8], (DIM_MODEL, DIM_FF), jnp.float32),
        "b1": s * jax.random.normal(ks[9], (1, DIM_FF), jnp.float32),
        "w2": s * jax.random.normal(ks[10], (DIM_FF, DIM_MODEL), jnp.float32),
        "b2": s * jax.random.normal(ks[11], (1, DIM_MODEL), jnp.float32),
        "g2": jnp.ones((1, DIM_MODEL), jnp.float32),
        "be2": jnp.zeros((1, DIM_MODEL), jnp.float32),
    }


def pack_params(p):
    """Consolidate the 16 per-layer tensors into 3 lane-aligned slabs
    (bf16 weights, f32 biases/LN/mask); scale + qkv biases folded in."""
    scale = 1.0 / math.sqrt(DIM_K)

    wa = np.zeros((NUM_HEADS, ATTN_ROWS, ATTN_COLS), np.float32)
    wo = np.asarray(p["wo"])
    for h in range(NUM_HEADS):
        wa[h, :DIM_MODEL, 0:DIM_K] = np.asarray(p["wq"][h]) * scale
        wa[h, :DIM_MODEL, DIM_K:2 * DIM_K] = np.asarray(p["wk"][h])
        wa[h, :DIM_MODEL, 2 * DIM_K:3 * DIM_K] = np.asarray(p["wv"][h])
        wa[h, ONES_COL, 0:DIM_K] = np.asarray(p["bq"][h][0]) * scale
        wa[h, ONES_COL, DIM_K:2 * DIM_K] = np.asarray(p["bk"][h][0])
        wa[h, ONES_COL, 2 * DIM_K:3 * DIM_K] = np.asarray(p["bv"][h][0])
        wa[h, :DIM_K, W_O_COL:W_O_COL + DIM_MODEL] = wo[h * DIM_K:(h + 1) * DIM_K, :]

    wf = np.zeros((FF_ROWS, FF_COLS), np.float32)
    wf[:DIM_MODEL, W_1_COL:W_1_COL + DIM_FF] = np.asarray(p["w1"])
    wf[:DIM_FF, W_2_COL:W_2_COL + DIM_MODEL] = np.asarray(p["w2"])   # un-transposed

    bs = np.zeros((BIAS_ROWS, BIAS_COLS), np.float32)
    bs[B_O_ROW, :DIM_MODEL] = np.asarray(p["bo"][0])
    bs[B_1_ROW, :DIM_FF] = np.asarray(p["b1"][0])
    bs[B_2_ROW, :DIM_MODEL] = np.asarray(p["b2"][0])
    bs[G_1_ROW, :DIM_MODEL] = np.asarray(p["g1"][0])
    bs[BE_1_ROW, :DIM_MODEL] = np.asarray(p["be1"][0])
    bs[G_2_ROW, :DIM_MODEL] = np.asarray(p["g2"][0])
    bs[BE_2_ROW, :DIM_MODEL] = np.asarray(p["be2"][0])
    # block-diagonal additive mask: row r may only attend to its own batch
    row_b = np.arange(BS)[:, None] // SEQ
    col_b = np.arange(BS)[None, :] // SEQ
    bs[MASK_ROW:MASK_ROW + BS, 0:BS] = np.where(row_b == col_b, 0.0, -1e30)

    return (jnp.asarray(wa, jnp.bfloat16),
            jnp.asarray(wf, jnp.bfloat16),
            jnp.asarray(bs, jnp.float32))


# ----------------------------- pure-JAX reference ----------------------------
def _layer_norm(v, g, b):
    mu = jnp.mean(v, axis=-1, keepdims=True)
    var = jnp.mean((v - mu) ** 2, axis=-1, keepdims=True)
    return (v - mu) * jax.lax.rsqrt(var + LN_EPS) * g + b


def reference_layer(x, p):
    heads = []
    for h in range(NUM_HEADS):
        q = x @ p["wq"][h] + p["bq"][h]
        k = x @ p["wk"][h] + p["bk"][h]
        v = x @ p["wv"][h] + p["bv"][h]
        s = jnp.einsum('bqd,bkd->bqk', q, k) / math.sqrt(DIM_K)
        heads.append(jnp.einsum('bqk,bkd->bqd', jax.nn.softmax(s, axis=-1), v))
    attn = jnp.concatenate(heads, axis=-1) @ p["wo"] + p["bo"]
    y = _layer_norm(x + attn, p["g1"], p["be1"])
    ff = jnp.maximum(y @ p["w1"] + p["b1"], 0.0) @ p["w2"] + p["b2"]
    return _layer_norm(y + ff, p["g2"], p["be2"])


# ----------------------------- main ------------------------------------------
if __name__ == "__main__":
    key = jax.random.PRNGKey(0)
    k_x, k_p = jax.random.split(key)
    x = jax.random.normal(k_x, (BATCH, SEQ, DIM_MODEL), jnp.float32)
    params = init_params(k_p)
    wa_slab, wf_slab, b_slab = pack_params(params)

    out = transformer_encoder_layer(x, wa_slab, wf_slab, b_slab)
    out = jax.block_until_ready(out)

    assert out.shape == (BATCH, SEQ, DIM_MODEL)
    assert bool(jnp.all(jnp.isfinite(out)))

    ref = reference_layer(x, params)
    max_err = float(jnp.max(jnp.abs(out - ref)))
    # bf16 MXU operands + approx softmax reciprocal => slightly relaxed tolerance
    assert max_err < 2e-2, f"mismatch vs pure-JAX reference: {max_err}"

    print("KERNEL_OK")
</pallas_src>

<mosaic_0001>
module attributes {stable_mosaic.version = 11 : i64} {
  func.func @encoder_layer_kernel(%arg0: memref<16x40xf32, #tpu.memory_space<vmem>>, %arg1: memref<4x40x256xbf16, #tpu.memory_space<vmem>>, %arg2: memref<64x256xbf16, #tpu.memory_space<vmem>>, %arg3: memref<24x128xf32, #tpu.memory_space<vmem>>, %arg4: memref<16x32xf32, #tpu.memory_space<vmem>>) attributes {dimension_semantics = [], scalar_prefetch = 0 : i64, scratch_operands = 0 : i64, tpu.core_type = #tpu.core_type<tc>} {
    %c0 = arith.constant 0 : index
    %c0_0 = arith.constant 0 : index
    %0 = vector.load %arg0[%c0, %c0_0] : memref<16x40xf32, #tpu.memory_space<vmem>>, vector<16x40xf32>
    %1 = vector.extract_strided_slice %0 {offsets = [0, 0], sizes = [16, 32], strides = [1, 1]} : vector<16x40xf32> to vector<16x32xf32>
    %2 = arith.truncf %0 : vector<16x40xf32> to vector<16x40xbf16>
    %c0_1 = arith.constant 0 : index
    %c0_2 = arith.constant 0 : index
    %c0_3 = arith.constant 0 : index
    %3 = vector.load %arg1[%c0_1, %c0_2, %c0_3] : memref<4x40x256xbf16, #tpu.memory_space<vmem>>, vector<4x40x24xbf16>
    %c0_4 = arith.constant 0 : index
    %c0_5 = arith.constant 0 : index
    %c128 = arith.constant 128 : index
    %4 = vector.load %arg1[%c0_4, %c0_5, %c128] : memref<4x40x256xbf16, #tpu.memory_space<vmem>>, vector<4x8x32xbf16>
    %c0_6 = arith.constant 0 : index
    %c0_7 = arith.constant 0 : index
    %5 = vector.load %arg2[%c0_6, %c0_7] : memref<64x256xbf16, #tpu.memory_space<vmem>>, vector<32x64xbf16>
    %c0_8 = arith.constant 0 : index
    %c128_9 = arith.constant 128 : index
    %6 = vector.load %arg2[%c0_8, %c128_9] : memref<64x256xbf16, #tpu.memory_space<vmem>>, vector<64x32xbf16>
    %c0_10 = arith.constant 0 : index
    %c0_11 = arith.constant 0 : index
    %7 = vector.load %arg3[%c0_10, %c0_11] : memref<24x128xf32, #tpu.memory_space<vmem>>, vector<1x32xf32>
    %c1 = arith.constant 1 : index
    %c0_12 = arith.constant 0 : index
    %8 = vector.load %arg3[%c1, %c0_12] : memref<24x128xf32, #tpu.memory_space<vmem>>, vector<1x64xf32>
    %c2 = arith.constant 2 : index
    %c0_13 = arith.constant 0 : index
    %9 = vector.load %arg3[%c2, %c0_13] : memref<24x128xf32, #tpu.memory_space<vmem>>, vector<1x32xf32>
    %c3 = arith.constant 3 : index
    %c0_14 = arith.constant 0 : index
    %10 = vector.load %arg3[%c3, %c0_14] : memref<24x128xf32, #tpu.memory_space<vmem>>, vector<1x32xf32>
    %c4 = arith.constant 4 : index
    %c0_15 = arith.constant 0 : index
    %11 = vector.load %arg3[%c4, %c0_15] : memref<24x128xf32, #tpu.memory_space<vmem>>, vector<1x32xf32>
    %c5 = arith.constant 5 : index
    %c0_16 = arith.constant 0 : index
    %12 = vector.load %arg3[%c5, %c0_16] : memref<24x128xf32, #tpu.memory_space<vmem>>, vector<1x32xf32>
    %c6 = arith.constant 6 : index
    %c0_17 = arith.constant 0 : index
    %13 = vector.load %arg3[%c6, %c0_17] : memref<24x128xf32, #tpu.memory_space<vmem>>, vector<1x32xf32>
    %c8 = arith.constant 8 : index
    %c0_18 = arith.constant 0 : index
    %14 = vector.load %arg3[%c8, %c0_18] : memref<24x128xf32, #tpu.memory_space<vmem>>, vector<16x16xf32>
    %15 = vector.shape_cast %2 : vector<16x40xbf16> to vector<1x16x40xbf16>
    %16 = vector.broadcast %15 : vector<1x16x40xbf16> to vector<4x16x40xbf16>
    %cst = arith.constant dense<0.000000e+00> : vector<4x16x24xf32>
    %17 = tpu.matmul %16, %3, %cst {dimension_numbers = #tpu.dot_dimension_numbers<[2], [1], [1], [2], [0, 0, 0, 1, 1, 2], [0], [0]>} : vector<4x16x40xbf16>, vector<4x40x24xbf16>, vector<4x16x24xf32> -> vector<4x16x24xf32>
    %18 = vector.extract_strided_slice %17 {offsets = [0, 0, 0], sizes = [4, 16, 8], strides = [1, 1, 1]} : vector<4x16x24xf32> to vector<4x16x8xf32>
    %19 = arith.truncf %18 : vector<4x16x8xf32> to vector<4x16x8xbf16>
    %20 = vector.extract_strided_slice %17 {offsets = [0, 0, 8], sizes = [4, 16, 8], strides = [1, 1, 1]} : vector<4x16x24xf32> to vector<4x16x8xf32>
    %21 = arith.truncf %20 : vector<4x16x8xf32> to vector<4x16x8xbf16>
    %22 = vector.extract_strided_slice %17 {offsets = [0, 0, 16], sizes = [4, 16, 8], strides = [1, 1, 1]} : vector<4x16x24xf32> to vector<4x16x8xf32>
    %23 = arith.truncf %22 : vector<4x16x8xf32> to vector<4x16x8xbf16>
    %cst_19 = arith.constant dense<0.000000e+00> : vector<4x16x16xf32>
    %24 = tpu.matmul %19, %21, %cst_19 {dimension_numbers = #tpu.dot_dimension_numbers<[2], [2], [1], [1], [0, 0, 0, 1, 1, 1], [0], [0]>} : vector<4x16x8xbf16>, vector<4x16x8xbf16>, vector<4x16x16xf32> -> vector<4x16x16xf32>
    %25 = vector.shape_cast %14 : vector<16x16xf32> to vector<1x16x16xf32>
    %26 = vector.broadcast %25 : vector<1x16x16xf32> to vector<4x16x16xf32>
    %27 = arith.addf %24, %26 : vector<4x16x16xf32>
    %cst_20 = arith.constant dense<0xFF800000> : vector<4x16xf32>
    %28 = vector.multi_reduction <maximumf>, %27, %cst_20 [2] : vector<4x16x16xf32> to vector<4x16xf32>
    %29 = vector.shape_cast %28 : vector<4x16xf32> to vector<4x16x1xf32>
    %30 = vector.broadcast %29 : vector<4x16x1xf32> to vector<4x16x16xf32>
    %31 = arith.subf %27, %30 : vector<4x16x16xf32>
    %32 = math.exp %31 : vector<4x16x16xf32>
    %cst_21 = arith.constant dense<0.000000e+00> : vector<4x16xf32>
    %33 = vector.multi_reduction <add>, %32, %cst_21 [2] : vector<4x16x16xf32> to vector<4x16xf32>
    %34 = vector.shape_cast %33 : vector<4x16xf32> to vector<4x16x1xf32>
    %35 = tpu.reciprocal %34 {approx = true} : vector<4x16x1xf32> -> vector<4x16x1xf32>
    %36 = vector.broadcast %35 : vector<4x16x1xf32> to vector<4x16x16xf32>
    %37 = arith.mulf %32, %36 : vector<4x16x16xf32>
    %38 = arith.truncf %37 : vector<4x16x16xf32> to vector<4x16x16xbf16>
    %cst_22 = arith.constant dense<0.000000e+00> : vector<4x16x8xf32>
    %39 = tpu.matmul %38, %23, %cst_22 {dimension_numbers = #tpu.dot_dimension_numbers<[2], [1], [1], [2], [0, 0, 0, 1, 1, 2], [0], [0]>} : vector<4x16x16xbf16>, vector<4x16x8xbf16>, vector<4x16x8xf32> -> vector<4x16x8xf32>
    %40 = arith.truncf %39 : vector<4x16x8xf32> to vector<4x16x8xbf16>
    %cst_23 = arith.constant dense<0.000000e+00> : vector<4x16x32xf32>
    %41 = tpu.matmul %40, %4, %cst_23 {dimension_numbers = #tpu.dot_dimension_numbers<[2], [1], [1], [2], [0, 0, 0, 1, 1, 2], [0], [0]>} : vector<4x16x8xbf16>, vector<4x8x32xbf16>, vector<4x16x32xf32> -> vector<4x16x32xf32>
    %42 = vector.extract_strided_slice %41 {offsets = [0, 0, 0], sizes = [1, 16, 32], strides = [1, 1, 1]} : vector<4x16x32xf32> to vector<1x16x32xf32>
    %43 = vector.shape_cast %42 : vector<1x16x32xf32> to vector<16x32xf32>
    %44 = vector.broadcast %7 : vector<1x32xf32> to vector<16x32xf32>
    %45 = arith.addf %44, %43 : vector<16x32xf32>
    %46 = vector.extract_strided_slice %41 {offsets = [1, 0, 0], sizes = [1, 16, 32], strides = [1, 1, 1]} : vector<4x16x32xf32> to vector<1x16x32xf32>
    %47 = vector.shape_cast %46 : vector<1x16x32xf32> to vector<16x32xf32>
    %48 = arith.addf %45, %47 : vector<16x32xf32>
    %49 = vector.extract_strided_slice %41 {offsets = [2, 0, 0], sizes = [1, 16, 32], strides = [1, 1, 1]} : vector<4x16x32xf32> to vector<1x16x32xf32>
    %50 = vector.shape_cast %49 : vector<1x16x32xf32> to vector<16x32xf32>
    %51 = arith.addf %48, %50 : vector<16x32xf32>
    %52 = vector.extract_strided_slice %41 {offsets = [3, 0, 0], sizes = [1, 16, 32], strides = [1, 1, 1]} : vector<4x16x32xf32> to vector<1x16x32xf32>
    %53 = vector.shape_cast %52 : vector<1x16x32xf32> to vector<16x32xf32>
    %54 = arith.addf %51, %53 : vector<16x32xf32>
    %55 = arith.addf %1, %54 : vector<16x32xf32>
    %cst_24 = arith.constant dense<0.000000e+00> : vector<16xf32>
    %56 = vector.multi_reduction <add>, %55, %cst_24 [1] : vector<16x32xf32> to vector<16xf32>
    %57 = vector.shape_cast %56 : vector<16xf32> to vector<16x1xf32>
    %cst_25 = arith.constant 3.200000e+01 : f32
    %58 = vector.broadcast %cst_25 : f32 to vector<16x1xf32>
    %59 = arith.divf %57, %58 : vector<16x1xf32>
    %60 = vector.broadcast %59 : vector<16x1xf32> to vector<16x32xf32>
    %61 = arith.subf %55, %60 : vector<16x32xf32>
    %62 = vector.broadcast %59 : vector<16x1xf32> to vector<16x32xf32>
    %63 = arith.subf %55, %62 : vector<16x32xf32>
    %64 = arith.mulf %61, %63 : vector<16x32xf32>
    %cst_26 = arith.constant dense<0.000000e+00> : vector<16xf32>
    %65 = vector.multi_reduction <add>, %64, %cst_26 [1] : vector<16x32xf32> to vector<16xf32>
    %66 = vector.shape_cast %65 : vector<16xf32> to vector<16x1xf32>
    %cst_27 = arith.constant 3.200000e+01 : f32
    %67 = vector.broadcast %cst_27 : f32 to vector<16x1xf32>
    %68 = arith.divf %66, %67 : vector<16x1xf32>
    %69 = vector.broadcast %59 : vector<16x1xf32> to vector<16x32xf32>
    %70 = arith.subf %55, %69 : vector<16x32xf32>
    %cst_28 = arith.constant 9.99999974E-6 : f32
    %71 = vector.broadcast %cst_28 : f32 to vector<16x1xf32>
    %72 = arith.addf %68, %71 : vector<16x1xf32>
    %73 = math.rsqrt %72 : vector<16x1xf32>
    %74 = vector.broadcast %73 : vector<16x1xf32> to vector<16x32xf32>
    %75 = arith.mulf %70, %74 : vector<16x32xf32>
    %76 = vector.broadcast %10 : vector<1x32xf32> to vector<16x32xf32>
    %77 = arith.mulf %75, %76 : vector<16x32xf32>
    %78 = vector.broadcast %11 : vector<1x32xf32> to vector<16x32xf32>
    %79 = arith.addf %77, %78 : vector<16x32xf32>
    %80 = arith.truncf %79 : vector<16x32xf32> to vector<16x32xbf16>
    %cst_29 = arith.constant dense<0.000000e+00> : vector<16x64xf32>
    %81 = tpu.matmul %80, %5, %cst_29 {dimension_numbers = #tpu.dot_dimension_numbers<[1], [0], [0], [1], [0, 0, 1, 1], [], []>} : vector<16x32xbf16>, vector<32x64xbf16>, vector<16x64xf32> -> vector<16x64xf32>
    %82 = vector.broadcast %8 : vector<1x64xf32> to vector<16x64xf32>
    %83 = arith.addf %81, %82 : vector<16x64xf32>
    %cst_30 = arith.constant 0.000000e+00 : f32
    %84 = vector.broadcast %cst_30 : f32 to vector<16x64xf32>
    %85 = arith.maximumf %83, %84 : vector<16x64xf32>
    %86 = arith.truncf %85 : vector<16x64xf32> to vector<16x64xbf16>
    %cst_31 = arith.constant dense<0.000000e+00> : vector<16x32xf32>
    %87 = tpu.matmul %86, %6, %cst_31 {dimension_numbers = #tpu.dot_dimension_numbers<[1], [0], [0], [1], [0, 0, 1, 1], [], []>} : vector<16x64xbf16>, vector<64x32xbf16>, vector<16x32xf32> -> vector<16x32xf32>
    %88 = vector.broadcast %9 : vector<1x32xf32> to vector<16x32xf32>
    %89 = arith.addf %87, %88 : vector<16x32xf32>
    %90 = arith.addf %79, %89 : vector<16x32xf32>
    %cst_32 = arith.constant dense<0.000000e+00> : vector<16xf32>
    %91 = vector.multi_reduction <add>, %90, %cst_32 [1] : vector<16x32xf32> to vector<16xf32>
    %92 = vector.shape_cast %91 : vector<16xf32> to vector<16x1xf32>
    %cst_33 = arith.constant 3.200000e+01 : f32
    %93 = vector.broadcast %cst_33 : f32 to vector<16x1xf32>
    %94 = arith.divf %92, %93 : vector<16x1xf32>
    %95 = vector.broadcast %94 : vector<16x1xf32> to vector<16x32xf32>
    %96 = arith.subf %90, %95 : vector<16x32xf32>
    %97 = vector.broadcast %94 : vector<16x1xf32> to vector<16x32xf32>
    %98 = arith.subf %90, %97 : vector<16x32xf32>
    %99 = arith.mulf %96, %98 : vector<16x32xf32>
    %cst_34 = arith.constant dense<0.000000e+00> : vector<16xf32>
    %100 = vector.multi_reduction <add>, %99, %cst_34 [1] : vector<16x32xf32> to vector<16xf32>
    %101 = vector.shape_cast %100 : vector<16xf32> to vector<16x1xf32>
    %cst_35 = arith.constant 3.200000e+01 : f32
    %102 = vector.broadcast %cst_35 : f32 to vector<16x1xf32>
    %103 = arith.divf %101, %102 : vector<16x1xf32>
    %104 = vector.broadcast %94 : vector<16x1xf32> to vector<16x32xf32>
    %105 = arith.subf %90, %104 : vector<16x32xf32>
    %cst_36 = arith.constant 9.99999974E-6 : f32
    %106 = vector.broadcast %cst_36 : f32 to vector<16x1xf32>
    %107 = arith.addf %103, %106 : vector<16x1xf32>
    %108 = math.rsqrt %107 : vector<16x1xf32>
    %109 = vector.broadcast %108 : vector<16x1xf32> to vector<16x32xf32>
    %110 = arith.mulf %105, %109 : vector<16x32xf32>
    %111 = vector.broadcast %12 : vector<1x32xf32> to vector<16x32xf32>
    %112 = arith.mulf %110, %111 : vector<16x32xf32>
    %113 = vector.broadcast %13 : vector<1x32xf32> to vector<16x32xf32>
    %114 = arith.addf %112, %113 : vector<16x32xf32>
    %c0_37 = arith.constant 0 : index
    %c0_38 = arith.constant 0 : index
    %115 = vector.load %arg4[%c0_37, %c0_38] : memref<16x32xf32, #tpu.memory_space<vmem>>, vector<16x32xf32>
    tpu.vector_store %arg4[%c0_37, %c0_38], %114 {strides = array<i32>} : memref<16x32xf32, #tpu.memory_space<vmem>>, vector<16x32xf32>,
    return
  }
}

</mosaic_0001>

<llo_original>
// kernel: tpu_custom_call.1
$region0: #{tpu_custom_call.1}
  #allocation0 [shape = 'u32[]', space=smem, size = 0x4, offset = 0x4, fixed_abs, tag = 'smem constant byte address 0x4 - core index']
  #allocation1 [shape = 'u32[144,128]{1,0:T(1,128)}', space=vmem, size = 0x12000, scoped, tag = 'internal scratch']
  %s0 = inlined_call_operand.hbm [shape: f32[16,40], index: 0, kind: input, shape index: {}]
  %s1 = inlined_call_operand.hbm [shape: bf16[4,40,256], index: 1, kind: input, shape index: {}]
  %s2 = inlined_call_operand.hbm [shape: bf16[64,256], index: 2, kind: input, shape index: {}]
  %s3 = inlined_call_operand.hbm [shape: f32[24,128], index: 3, kind: input, shape index: {}]
  %s4 = inlined_call_operand.hbm [shape: f32[16,32], index: 4, kind: output, shape index: {}]
  %s5 = sld [smem:[#allocation0]]
  $region42: #{tpu_custom_call.1} parent=0
    _
  %s7 = ssub.s32 1, %s5
  %s8 = scalar_select 0, %s7, %s5
  $region1: #{tpu_custom_call.1} parent=0
    #allocation2 [shape = 'u8[8192]{0}', space=vmem, size = 0x2000, scoped, tag = 'input window, operand 0, single buffered']
    #allocation3 [shape = 's32[1]{0}', space=sflag, size = 0x4, scoped, tag = 'scoped memory for tpu_custom_call.1']
    #allocation4 [shape = 's32[1]{0}', space=sflag, size = 0x4, scoped, tag = 'scoped memory for tpu_custom_call.1']
    #allocation5 [shape = 'u8[81920]{0}', space=vmem, size = 0x14000, scoped, tag = 'input window, operand 1, single buffered']
    #allocation6 [shape = 's32[1]{0}', space=sflag, size = 0x4, scoped, tag = 'scoped memory for tpu_custom_call.1']
    #allocation7 [shape = 'u8[32768]{0}', space=vmem, size = 0x8000, scoped, tag = 'input window, operand 2, single buffered']
    #allocation8 [shape = 'u8[12288]{0}', space=vmem, size = 0x3000, scoped, tag = 'input window, operand 3, single buffered']
    #allocation9 [shape = 's32[1]{0}', space=sflag, size = 0x4, scoped, tag = 'scoped memory for tpu_custom_call.1']
    #allocation10 [shape = 'u8[8192]{0}', space=vmem, size = 0x2000, scoped, tag = 'output window, operand 0, single buffered']
    %9 = vsyncpa [#allocation3], 0
    %10 = vsyncpa [#allocation6], 0
    %11 = vsyncpa [#allocation9], 0
    %12 = vsyncpa [#allocation4], 0
    // Predicated region
    $region2: #{tpu_custom_call.1} parent=1 // pred_check
      _
    $region3: #{tpu_custom_call.1} parent=1 // pred_check_branch
      %14 = sbr.rel (0) target = $region5
    $region4: #{tpu_custom_call.1} parent=1 // pred_region
      %s16 = ssub.s32 256, 256
      %17 = vsyncadd [#allocation3], %s16
      %s18 = sshll.u32 [#allocation2], 4
      %s19 = int_to_ptr.vmem [resolvable:$true] %s18
      %24 = dma.hbm_to_vmem [thread:$0]  %s0, 256, %s19, [#allocation3], 128, 128, 8
    $region5: #{tpu_custom_call.1} parent=1 // pred_fallthru
      _
    // Predicated region
    $region6: #{tpu_custom_call.1} parent=1 // pred_check
      _
    $region7: #{tpu_custom_call.1} parent=1 // pred_check_branch
      %26 = sbr.rel (0) target = $region9
    $region8: #{tpu_custom_call.1} parent=1 // pred_region
      %s28 = ssub.s32 2560, 2560
      %29 = vsyncadd [#allocation6], %s28
      %s30 = sshll.u32 [#allocation5], 4
      %s31 = int_to_ptr.vmem [resolvable:$true] %s30
      %36 = dma.hbm_to_vmem [thread:$0]  %s1, 2560, %s31, [#allocation6], 128, 128, 8
    $region9: #{tpu_custom_call.1} parent=1 // pred_fallthru
      _
    // Predicated region
    $region10: #{tpu_custom_call.1} parent=1 // pred_check
      _
    $region11: #{tpu_custom_call.1} parent=1 // pred_check_branch
      %38 = sbr.rel (0) target = $region13
    $region12: #{tpu_custom_call.1} parent=1 // pred_region
      %s40 = ssub.s32 1024, 1024
      %41 = vsyncadd [#allocation6], %s40
      %s42 = sshll.u32 [#allocation7], 4
      %s43 = int_to_ptr.vmem [resolvable:$true] %s42
      %48 = dma.hbm_to_vmem [thread:$0]  %s2, 1024, %s43, [#allocation6], 128, 128, 8
    $region13: #{tpu_custom_call.1} parent=1 // pred_fallthru
      _
    // Predicated region
    $region14: #{tpu_custom_call.1} parent=1 // pred_check
      _
    $region15: #{tpu_custom_call.1} parent=1 // pred_check_branch
      %50 = sbr.rel (0) target = $region17
    $region16: #{tpu_custom_call.1} parent=1 // pred_region
      %s52 = ssub.s32 384, 384
      %53 = vsyncadd [#allocation9], %s52
      %s54 = sshll.u32 [#allocation8], 4
      %s55 = int_to_ptr.vmem [resolvable:$true] %s54
      %60 = dma.hbm_to_vmem [thread:$0]  %s3, 384, %s55, [#allocation9], 128, 128, 8
    $region17: #{tpu_custom_call.1} parent=1 // pred_fallthru
      _
    // Predicated region
    $region18: #{tpu_custom_call.1} parent=1 // pred_check
      _
    $region19: #{tpu_custom_call.1} parent=1 // pred_check_branch
      %62 = sbr.rel (0) target = $region21
    $region20: #{tpu_custom_call.1} parent=1 // pred_region
      %63 = dma.done [#allocation3], 256
    $region21: #{tpu_custom_call.1} parent=1 // pred_fallthru
      _
    // Predicated region
    $region22: #{tpu_custom_call.1} parent=1 // pred_check
      _
    $region23: #{tpu_custom_call.1} parent=1 // pred_check_branch
      %65 = sbr.rel (0) target = $region25
    $region24: #{tpu_custom_call.1} parent=1 // pred_region
      %66 = dma.done [#allocation6], 2560
    $region25: #{tpu_custom_call.1} parent=1 // pred_fallthru
      _
    // Predicated region
    $region26: #{tpu_custom_call.1} parent=1 // pred_check
      _
    $region27: #{tpu_custom_call.1} parent=1 // pred_check_branch
      %68 = sbr.rel (0) target = $region29
    $region28: #{tpu_custom_call.1} parent=1 // pred_region
      %69 = dma.done [#allocation6], 1024
    $region29: #{tpu_custom_call.1} parent=1 // pred_fallthru
      _
    // Predicated region
    $region30: #{tpu_custom_call.1} parent=1 // pred_check
      _
    $region31: #{tpu_custom_call.1} parent=1 // pred_check_branch
      %71 = sbr.rel (0) target = $region33
    $region32: #{tpu_custom_call.1} parent=1 // pred_region
      %72 = dma.done [#allocation9], 384
    $region33: #{tpu_custom_call.1} parent=1 // pred_fallthru
      _
    %v74 = vld [vmem:[#allocation2] sm:$0xff]
    %v75 = vld [vmem:[#allocation2 + $0x8] sm:$0xff]
    %v76 = vpack.c.bf16 %v75, %v74
    %v77 = vld [vmem:[#allocation5] sm:$0xf]
    %v78 = vld [vmem:[#allocation5 + $0x8] sm:$0xf]
    %v79 = vld [vmem:[#allocation5 + $0x10] sm:$0xf]
    %v80 = vld [vmem:[#allocation5 + $0x18] sm:$0xf]
    %v81 = vld [vmem:[#allocation5 + $0x20] sm:$0xf]
    %v82 = vld [vmem:[#allocation5 + $0x28] sm:$0xf]
    %v83 = vld [vmem:[#allocation5 + $0x30] sm:$0xf]
    %v84 = vld [vmem:[#allocation5 + $0x38] sm:$0xf]
    %v85 = vld [vmem:[#allocation5 + $0x40] sm:$0xf]
    %v86 = vld [vmem:[#allocation5 + $0x48] sm:$0xf]
    %v87 = vld [vmem:[#allocation5 + $0x50] sm:$0xf]
    %v88 = vld [vmem:[#allocation5 + $0x58] sm:$0xf]
    %v89 = vld [vmem:[#allocation5 + $0x60] sm:$0xf]
    %v90 = vld [vmem:[#allocation5 + $0x68] sm:$0xf]
    %v91 = vld [vmem:[#allocation5 + $0x70] sm:$0xf]
    %v92 = vld [vmem:[#allocation5 + $0x78] sm:$0xf]
    %v93 = vld [vmem:[#allocation5 + $0x80] sm:$0xf]
    %v94 = vld [vmem:[#allocation5 + $0x88] sm:$0xf]
    %v95 = vld [vmem:[#allocation5 + $0x90] sm:$0xf]
    %v96 = vld [vmem:[#allocation5 + $0x98] sm:$0xf]
    %v97 = vld [vmem:[#allocation5 + $0x4] sm:$0xf]
    %v98 = vld [vmem:[#allocation5 + $0x2c] sm:$0xf]
    %v99 = vld [vmem:[#allocation5 + $0x54] sm:$0xf]
    %v100 = vld [vmem:[#allocation5 + $0x7c] sm:$0xf]
    %v101 = vld [vmem:[#allocation7] sm:$0xf]
    %v102 = vld [vmem:[#allocation7 + $0x8] sm:$0xf]
    %v103 = vld [vmem:[#allocation7 + $0x10] sm:$0xf]
    %v104 = vld [vmem:[#allocation7 + $0x18] sm:$0xf]
    %v105 = vld [vmem:[#allocation7 + $0x4] sm:$0xf]
    %v106 = vld [vmem:[#allocation7 + $0xc] sm:$0xf]
    %v107 = vld [vmem:[#allocation7 + $0x14] sm:$0xf]
    %v108 = vld [vmem:[#allocation7 + $0x1c] sm:$0xf]
    %v109 = vld [vmem:[#allocation7 + $0x24] sm:$0xf]
    %v110 = vld [vmem:[#allocation7 + $0x2c] sm:$0xf]
    %v111 = vld [vmem:[#allocation7 + $0x34] sm:$0xf]
    %v112 = vld [vmem:[#allocation7 + $0x3c] sm:$0xf]
    %v113 = vld [vmem:[#allocation8] sm:$0x1]
    %v114 = vld [vmem:[#allocation8 + $0x1] sm:$0x1]
    %v115 = vld [vmem:[#allocation8 + $0x2] sm:$0x1]
    %v116 = vld [vmem:[#allocation8 + $0x3] sm:$0x1]
    %v117 = vld [vmem:[#allocation8 + $0x4] sm:$0x1]
    %v118 = vld [vmem:[#allocation8 + $0x5] sm:$0x1]
    %v119 = vld [vmem:[#allocation8 + $0x6] sm:$0x1]
    %v120 = vld [vmem:[#allocation8 + $0x8] sm:$0xff]
    %v121 = vld [vmem:[#allocation8 + $0x10] sm:$0xff]
    %v127 = vunpack.c.l.b16 %v77
    %v128 = vunpack.c.l.b16 %v78
    %v129 = vunpack.c.l.b16 %v79
    %v130 = vunpack.c.l.b16 %v80
    %v131 = vunpack.c.l.b16 %v81
    %v132 = vpack.c.b16 %v128, %v127
    %v133 = vpack.c.b16 %v130, %v129
    %v134 = vpack.c.b16 %v131, %v131
    %vm137 = vcmask 326656
    %v139 = vsel %vm137, %v76, 0
    %vm141 = vcmask 1043456
    %v143 = vsel %vm141, %v134, 0
    %145 = vmatprep.subr.bf16.mxu0 0
    %146 = vmatpush1.bf16.msra.mxu0 %v132
    %147 = vmatprep.subr.bf16.mxu0 0
    %148 = vmatpush1.bf16.msra.mxu0 %v133
    %149 = vmatprep.subr.bf16.mxu0 0
    %150 = vmatpush1.bf16.msra.mxu0 %v143
    %151 = vmatprep.subr.bf16.mxu0 0
    %152 = vmatpush1.bf16.msra.mxu0 0
    %153 = vmatprep.subr.bf16.mxu0 0
    %154 = vmatpush1.bf16.msra.mxu0 0
    %155 = vmatprep.subr.bf16.mxu0 0
    %156 = vmatpush1.bf16.msra.mxu0 0
    %157 = vmatprep.subr.bf16.mxu0 0
    %158 = vmatpush1.bf16.msra.mxu0 0
    %159 = vmatprep.subr.bf16.mxu0 0
    %160 = vmatpush1.bf16.msra.mxu0 0
    %161 = vmatprep.subr.bf16.mxu0 0
    %162 = vmatpush1.bf16.msra.mxu0 0
    %163 = vmatprep.subr.bf16.mxu0 0
    %164 = vmatpush1.bf16.msra.mxu0 0
    %165 = vmatprep.subr.bf16.mxu0 0
    %166 = vmatpush1.bf16.msra.mxu0 0
    %167 = vmatprep.subr.bf16.mxu0 0
    %168 = vmatpush1.bf16.msra.mxu0 0
    %169 = vmatprep.subr.bf16.mxu0 0
    %170 = vmatpush1.bf16.msra.mxu0 0
    %171 = vmatprep.subr.bf16.mxu0 0
    %172 = vmatpush1.bf16.msra.mxu0 0
    %173 = vmatprep.subr.bf16.mxu0 0
    %174 = vmatpush1.bf16.msra.mxu0 0
    %175 = vmatprep.subr.bf16.mxu0 0
    %176 = vmatpush1.bf16.msra.mxu0 0
    %177 = vmatprep.mubr.bf16.mxu0 0
    %178 = vmatmul.mubr.bf16.gmra.mrb[0].mxu0 %v139
    %v179 = vpop.f32.mrb[0].mxu0
    %v180 = vadd.f32 0.0, %v179
    %v181 = vpop.f32.mrb[0].mxu0
    %v182 = vpop.f32.mrb[0].mxu0
    %v183 = vadd.f32 0.0, %v182
    %v184 = vpop.f32.mrb[0].mxu0
    %185 = vdwg.mxu0
    %v191 = vunpack.c.l.b16 %v82
    %v192 = vunpack.c.l.b16 %v83
    %v193 = vunpack.c.l.b16 %v84
    %v194 = vunpack.c.l.b16 %v85
    %v195 = vunpack.c.l.b16 %v86
    %v196 = vpack.c.b16 %v192, %v191
    %v197 = vpack.c.b16 %v194, %v193
    %v198 = vpack.c.b16 %v195, %v195
    %v202 = vsel %vm141, %v198, 0
    %204 = vmatprep.subr.bf16.mxu0 0
    %205 = vmatpush1.bf16.msra.mxu0 %v196
    %206 = vmatprep.subr.bf16.mxu0 0
    %207 = vmatpush1.bf16.msra.mxu0 %v197
    %208 = vmatprep.subr.bf16.mxu0 0
    %209 = vmatpush1.bf16.msra.mxu0 %v202
    %210 = vmatprep.subr.bf16.mxu0 0
    %211 = vmatpush1.bf16.msra.mxu0 0
    %212 = vmatprep.subr.bf16.mxu0 0
    %213 = vmatpush1.bf16.msra.mxu0 0
    %214 = vmatprep.subr.bf16.mxu0 0
    %215 = vmatpush1.bf16.msra.mxu0 0
    %216 = vmatprep.subr.bf16.mxu0 0
    %217 = vmatpush1.bf16.msra.mxu0 0
    %218 = vmatprep.subr.bf16.mxu0 0
    %219 = vmatpush1.bf16.msra.mxu0 0
    %220 = vmatprep.subr.bf16.mxu0 0
    %221 = vmatpush1.bf16.msra.mxu0 0
    %222 = vmatprep.subr.bf16.mxu0 0
    %223 = vmatpush1.bf16.msra.mxu0 0
    %224 = vmatprep.subr.bf16.mxu0 0
    %225 = vmatpush1.bf16.msra.mxu0 0
    %226 = vmatprep.subr.bf16.mxu0 0
    %227 = vmatpush1.bf16.msra.mxu0 0
    %228 = vmatprep.subr.bf16.mxu0 0
    %229 = vmatpush1.bf16.msra.mxu0 0
    %230 = vmatprep.subr.bf16.mxu0 0
    %231 = vmatpush1.bf16.msra.mxu0 0
    %232 = vmatprep.subr.bf16.mxu0 0
    %233 = vmatpush1.bf16.msra.mxu0 0
    %234 = vmatprep.subr.bf16.mxu0 0
    %235 = vmatpush1.bf16.msra.mxu0 0
    %236 = vmatprep.mubr.bf16.mxu0 0
    %237 = vmatmul.mubr.bf16.gmra.mrb[0].mxu0 %v139
    %v238 = vpop.f32.mrb[0].mxu0
    %v239 = vadd.f32 0.0, %v238
    %v240 = vpop.f32.mrb[0].mxu0
    %v241 = vpop.f32.mrb[0].mxu0
    %v242 = vadd.f32 0.0, %v241
    %v243 = vpop.f32.mrb[0].mxu0
    %244 = vdwg.mxu0
    %v250 = vunpack.c.l.b16 %v87
    %v251 = vunpack.c.l.b16 %v88
    %v252 = vunpack.c.l.b16 %v89
    %v253 = vunpack.c.l.b16 %v90
    %v254 = vunpack.c.l.b16 %v91
    %v255 = vpack.c.b16 %v251, %v250
    %v256 = vpack.c.b16 %v253, %v252
    %v257 = vpack.c.b16 %v254, %v254
    %v261 = vsel %vm141, %v257, 0
    %263 = vmatprep.subr.bf16.mxu0 0
    %264 = vmatpush1.bf16.msra.mxu0 %v255
    %265 = vmatprep.subr.bf16.mxu0 0
    %266 = vmatpush1.bf16.msra.mxu0 %v256
    %267 = vmatprep.subr.bf16.mxu0 0
    %268 = vmatpush1.bf16.msra.mxu0 %v261
    %269 = vmatprep.subr.bf16.mxu0 0
    %270 = vmatpush1.bf16.msra.mxu0 0
    %271 = vmatprep.subr.bf16.mxu0 0
    %272 = vmatpush1.bf16.msra.mxu0 0
    %273 = vmatprep.subr.bf16.mxu0 0
    %274 = vmatpush1.bf16.msra.mxu0 0
    %275 = vmatprep.subr.bf16.mxu0 0
    %276 = vmatpush1.bf16.msra.mxu0 0
    %277 = vmatprep.subr.bf16.mxu0 0
    %278 = vmatpush1.bf16.msra.mxu0 0
    %279 = vmatprep.subr.bf16.mxu0 0
    %280 = vmatpush1.bf16.msra.mxu0 0
    %281 = vmatprep.subr.bf16.mxu0 0
    %282 = vmatpush1.bf16.msra.mxu0 0
    %283 = vmatprep.subr.bf16.mxu0 0
    %284 = vmatpush1.bf16.msra.mxu0 0
    %285 = vmatprep.subr.bf16.mxu0 0
    %286 = vmatpush1.bf16.msra.mxu0 0
    %287 = vmatprep.subr.bf16.mxu0 0
    %288 = vmatpush1.bf16.msra.mxu0 0
    %289 = vmatprep.subr.bf16.mxu0 0
    %290 = vmatpush1.bf16.msra.mxu0 0
    %291 = vmatprep.subr.bf16.mxu0 0
    %292 = vmatpush1.bf16.msra.mxu0 0
    %293 = vmatprep.subr.bf16.mxu0 0
    %294 = vmatpush1.bf16.msra.mxu0 0
    %295 = vmatprep.mubr.bf16.mxu0 0
    %296 = vmatmul.mubr.bf16.gmra.mrb[0].mxu0 %v139
    %v297 = vpop.f32.mrb[0].mxu0
    %v298 = vadd.f32 0.0, %v297
    %v299 = vpop.f32.mrb[0].mxu0
    %v300 = vpop.f32.mrb[0].mxu0
    %v301 = vadd.f32 0.0, %v300
    %v302 = vpop.f32.mrb[0].mxu0
    %303 = vdwg.mxu0
    %v309 = vunpack.c.l.b16 %v92
    %v310 = vunpack.c.l.b16 %v93
    %v311 = vunpack.c.l.b16 %v94
    %v312 = vunpack.c.l.b16 %v95
    %v313 = vunpack.c.l.b16 %v96
    %v314 = vpack.c.b16 %v310, %v309
    %v315 = vpack.c.b16 %v312, %v311
    %v316 = vpack.c.b16 %v313, %v313
    %v320 = vsel %vm141, %v316, 0
    %322 = vmatprep.subr.bf16.mxu0 0
    %323 = vmatpush1.bf16.msra.mxu0 %v314
    %324 = vmatprep.subr.bf16.mxu0 0
    %325 = vmatpush1.bf16.msra.mxu0 %v315
    %326 = vmatprep.subr.bf16.mxu0 0
    %327 = vmatpush1.bf16.msra.mxu0 %v320
    %328 = vmatprep.subr.bf16.mxu0 0
    %329 = vmatpush1.bf16.msra.mxu0 0
    %330 = vmatprep.subr.bf16.mxu0 0
    %331 = vmatpush1.bf16.msra.mxu0 0
    %332 = vmatprep.subr.bf16.mxu0 0
    %333 = vmatpush1.bf16.msra.mxu0 0
    %334 = vmatprep.subr.bf16.mxu0 0
    %335 = vmatpush1.bf16.msra.mxu0 0
    %336 = vmatprep.subr.bf16.mxu0 0
    %337 = vmatpush1.bf16.msra.mxu0 0
    %338 = vmatprep.subr.bf16.mxu0 0
    %339 = vmatpush1.bf16.msra.mxu0 0
    %340 = vmatprep.subr.bf16.mxu0 0
    %341 = vmatpush1.bf16.msra.mxu0 0
    %342 = vmatprep.subr.bf16.mxu0 0
    %343 = vmatpush1.bf16.msra.mxu0 0
    %344 = vmatprep.subr.bf16.mxu0 0
    %345 = vmatpush1.bf16.msra.mxu0 0
    %346 = vmatprep.subr.bf16.mxu0 0
    %347 = vmatpush1.bf16.msra.mxu0 0
    %348 = vmatprep.subr.bf16.mxu0 0
    %349 = vmatpush1.bf16.msra.mxu0 0
    %350 = vmatprep.subr.bf16.mxu0 0
    %351 = vmatpush1.bf16.msra.mxu0 0
    %352 = vmatprep.subr.bf16.mxu0 0
    %353 = vmatpush1.bf16.msra.mxu0 0
    %354 = vmatprep.mubr.bf16.mxu0 0
    %355 = vmatmul.mubr.bf16.gmra.mrb[0].mxu0 %v139
    %v356 = vpop.f32.mrb[0].mxu0
    %v357 = vadd.f32 0.0, %v356
    %v358 = vpop.f32.mrb[0].mxu0
    %v359 = vpop.f32.mrb[0].mxu0
    %v360 = vadd.f32 0.0, %v359
    %v361 = vpop.f32.mrb[0].mxu0
    %362 = vdwg.mxu0
    %v363 = vpack.c.bf16 %v183, %v180
    %v364 = vpack.c.bf16 %v242, %v239
    %v365 = vpack.c.bf16 %v301, %v298
    %v366 = vpack.c.bf16 %v360, %v357
    %368 = vrot.lane.b32.xlu0 %v363, 120
    %v369 = vpop.permute.xlu0 %368
    %vm370 = vcmask 64512
    %v372 = vsel %vm370, %v363, 0
    %v375 = vsel %vm370, %v369, 0
    %377 = vmatprep.subr.bf16.mxu0 0
    %378 = vmatpush1.bf16.xpose.msra.mxu0 %v375
    %379 = vmatprep.subr.bf16.mxu0 0
    %380 = vmatpush1.bf16.xpose.msra.mxu0 0
    %381 = vmatprep.subr.bf16.mxu0 0
    %382 = vmatpush1.bf16.xpose.msra.mxu0 0
    %383 = vmatprep.subr.bf16.mxu0 0
    %384 = vmatpush1.bf16.xpose.msra.mxu0 0
    %385 = vmatprep.subr.bf16.mxu0 0
    %386 = vmatpush1.bf16.xpose.msra.mxu0 0
    %387 = vmatprep.subr.bf16.mxu0 0
    %388 = vmatpush1.bf16.xpose.msra.mxu0 0
    %389 = vmatprep.subr.bf16.mxu0 0
    %390 = vmatpush1.bf16.xpose.msra.mxu0 0
    %391 = vmatprep.subr.bf16.mxu0 0
    %392 = vmatpush1.bf16.xpose.msra.mxu0 0
    %393 = vmatprep.subr.bf16.mxu0 0
    %394 = vmatpush1.bf16.xpose.msra.mxu0 0
    %395 = vmatprep.subr.bf16.mxu0 0
    %396 = vmatpush1.bf16.xpose.msra.mxu0 0
    %397 = vmatprep.subr.bf16.mxu0 0
    %398 = vmatpush1.bf16.xpose.msra.mxu0 0
    %399 = vmatprep.subr.bf16.mxu0 0
    %400 = vmatpush1.bf16.xpose.msra.mxu0 0
    %401 = vmatprep.subr.bf16.mxu0 0
    %402 = vmatpush1.bf16.xpose.msra.mxu0 0
    %403 = vmatprep.subr.bf16.mxu0 0
    %404 = vmatpush1.bf16.xpose.msra.mxu0 0
    %405 = vmatprep.subr.bf16.mxu0 0
    %406 = vmatpush1.bf16.xpose.msra.mxu0 0
    %407 = vmatprep.subr.bf16.mxu0 0
    %408 = vmatpush1.bf16.xpose.msra.mxu0 0
    %409 = vmatprep.mubr.bf16.mxu0 0
    %410 = vmatmul.mubr.bf16.gmra.mrb[0].mxu0 %v372
    %v411 = vpop.f32.mrb[0].mxu0
    %v412 = vadd.f32 %v120, %v411
    %v413 = vpop.f32.mrb[0].mxu0
    %v414 = vpop.f32.mrb[0].mxu0
    %v415 = vadd.f32 %v121, %v414
    %v416 = vpop.f32.mrb[0].mxu0
    %417 = vdwg.mxu0
    %419 = vrot.lane.b32.xlu0 %v364, 120
    %v420 = vpop.permute.xlu0 %419
    %v422 = vsel %vm370, %v364, 0
    %v425 = vsel %vm370, %v420, 0
    %427 = vmatprep.subr.bf16.mxu0 0
    %428 = vmatpush1.bf16.xpose.msra.mxu0 %v425
    %429 = vmatprep.subr.bf16.mxu0 0
    %430 = vmatpush1.bf16.xpose.msra.mxu0 0
    %431 = vmatprep.subr.bf16.mxu0 0
    %432 = vmatpush1.bf16.xpose.msra.mxu0 0
    %433 = vmatprep.subr.bf16.mxu0 0
    %434 = vmatpush1.bf16.xpose.msra.mxu0 0
    %435 = vmatprep.subr.bf16.mxu0 0
    %436 = vmatpush1.bf16.xpose.msra.mxu0 0
    %437 = vmatprep.subr.bf16.mxu0 0
    %438 = vmatpush1.bf16.xpose.msra.mxu0 0
    %439 = vmatprep.subr.bf16.mxu0 0
    %440 = vmatpush1.bf16.xpose.msra.mxu0 0
    %441 = vmatprep.subr.bf16.mxu0 0
    %442 = vmatpush1.bf16.xpose.msra.mxu0 0
    %443 = vmatprep.subr.bf16.mxu0 0
    %444 = vmatpush1.bf16.xpose.msra.mxu0 0
    %445 = vmatprep.subr.bf16.mxu0 0
    %446 = vmatpush1.bf16.xpose.msra.mxu0 0
    %447 = vmatprep.subr.bf16.mxu0 0
    %448 = vmatpush1.bf16.xpose.msra.mxu0 0
    %449 = vmatprep.subr.bf16.mxu0 0
    %450 = vmatpush1.bf16.xpose.msra.mxu0 0
    %451 = vmatprep.subr.bf16.mxu0 0
    %452 = vmatpush1.bf16.xpose.msra.mxu0 0
    %453 = vmatprep.subr.bf16.mxu0 0
    %454 = vmatpush1.bf16.xpose.msra.mxu0 0
    %455 = vmatprep.subr.bf16.mxu0 0
    %456 = vmatpush1.bf16.xpose.msra.mxu0 0
    %457 = vmatprep.subr.bf16.mxu0 0
    %458 = vmatpush1.bf16.xpose.msra.mxu0 0
    %459 = vmatprep.mubr.bf16.mxu0 0
    %460 = vmatmul.mubr.bf16.gmra.mrb[0].mxu0 %v422
    %v461 = vpop.f32.mrb[0].mxu0
    %v462 = vadd.f32 %v120, %v461
    %v463 = vpop.f32.mrb[0].mxu0
    %v464 = vpop.f32.mrb[0].mxu0
    %v465 = vadd.f32 %v121, %v464
    %v466 = vpop.f32.mrb[0].mxu0
    %467 = vdwg.mxu0
    %469 = vrot.lane.b32.xlu0 %v365, 120
    %v470 = vpop.permute.xlu0 %469
    %v472 = vsel %vm370, %v365, 0
    %v475 = vsel %vm370, %v470, 0
    %477 = vmatprep.subr.bf16.mxu0 0
    %478 = vmatpush1.bf16.xpose.msra.mxu0 %v475
    %479 = vmatprep.subr.bf16.mxu0 0
    %480 = vmatpush1.bf16.xpose.msra.mxu0 0
    %481 = vmatprep.subr.bf16.mxu0 0
    %482 = vmatpush1.bf16.xpose.msra.mxu0 0
    %483 = vmatprep.subr.bf16.mxu0 0
    %484 = vmatpush1.bf16.xpose.msra.mxu0 0
    %485 = vmatprep.subr.bf16.mxu0 0
    %486 = vmatpush1.bf16.xpose.msra.mxu0 0
    %487 = vmatprep.subr.bf16.mxu0 0
    %488 = vmatpush1.bf16.xpose.msra.mxu0 0
    %489 = vmatprep.subr.bf16.mxu0 0
    %490 = vmatpush1.bf16.xpose.msra.mxu0 0
    %491 = vmatprep.subr.bf16.mxu0 0
    %492 = vmatpush1.bf16.xpose.msra.mxu0 0
    %493 = vmatprep.subr.bf16.mxu0 0
    %494 = vmatpush1.bf16.xpose.msra.mxu0 0
    %495 = vmatprep.subr.bf16.mxu0 0
    %496 = vmatpush1.bf16.xpose.msra.mxu0 0
    %497 = vmatprep.subr.bf16.mxu0 0
    %498 = vmatpush1.bf16.xpose.msra.mxu0 0
    %499 = vmatprep.subr.bf16.mxu0 0
    %500 = vmatpush1.bf16.xpose.msra.mxu0 0
    %501 = vmatprep.subr.bf16.mxu0 0
    %502 = vmatpush1.bf16.xpose.msra.mxu0 0
    %503 = vmatprep.subr.bf16.mxu0 0
    %504 = vmatpush1.bf16.xpose.msra.mxu0 0
    %505 = vmatprep.subr.bf16.mxu0 0
    %506 = vmatpush1.bf16.xpose.msra.mxu0 0
    %507 = vmatprep.subr.bf16.mxu0 0
    %508 = vmatpush1.bf16.xpose.msra.mxu0 0
    %509 = vmatprep.mubr.bf16.mxu0 0
    %510 = vmatmul.mubr.bf16.gmra.mrb[0].mxu0 %v472
    %v511 = vpop.f32.mrb[0].mxu0
    %v512 = vadd.f32 %v120, %v511
    %v513 = vpop.f32.mrb[0].mxu0
    %v514 = vpop.f32.mrb[0].mxu0
    %v515 = vadd.f32 %v121, %v514
    %v516 = vpop.f32.mrb[0].mxu0
    %517 = vdwg.mxu0
    %519 = vrot.lane.b32.xlu0 %v366, 120
    %v520 = vpop.permute.xlu0 %519
    %v522 = vsel %vm370, %v366, 0
    %v525 = vsel %vm370, %v520, 0
    %527 = vmatprep.subr.bf16.mxu0 0
    %528 = vmatpush1.bf16.xpose.msra.mxu0 %v525
    %529 = vmatprep.subr.bf16.mxu0 0
    %530 = vmatpush1.bf16.xpose.msra.mxu0 0
    %531 = vmatprep.subr.bf16.mxu0 0
    %532 = vmatpush1.bf16.xpose.msra.mxu0 0
    %533 = vmatprep.subr.bf16.mxu0 0
    %534 = vmatpush1.bf16.xpose.msra.mxu0 0
    %535 = vmatprep.subr.bf16.mxu0 0
    %536 = vmatpush1.bf16.xpose.msra.mxu0 0
    %537 = vmatprep.subr.bf16.mxu0 0
    %538 = vmatpush1.bf16.xpose.msra.mxu0 0
    %539 = vmatprep.subr.bf16.mxu0 0
    %540 = vmatpush1.bf16.xpose.msra.mxu0 0
    %541 = vmatprep.subr.bf16.mxu0 0
    %542 = vmatpush1.bf16.xpose.msra.mxu0 0
    %543 = vmatprep.subr.bf16.mxu0 0
    %544 = vmatpush1.bf16.xpose.msra.mxu0 0
    %545 = vmatprep.subr.bf16.mxu0 0
    %546 = vmatpush1.bf16.xpose.msra.mxu0 0
    %547 = vmatprep.subr.bf16.mxu0 0
    %548 = vmatpush1.bf16.xpose.msra.mxu0 0
    %549 = vmatprep.subr.bf16.mxu0 0
    %550 = vmatpush1.bf16.xpose.msra.mxu0 0
    %551 = vmatprep.subr.bf16.mxu0 0
    %552 = vmatpush1.bf16.xpose.msra.mxu0 0
    %553 = vmatprep.subr.bf16.mxu0 0
    %554 = vmatpush1.bf16.xpose.msra.mxu0 0
    %555 = vmatprep.subr.bf16.mxu0 0
    %556 = vmatpush1.bf16.xpose.msra.mxu0 0
    %557 = vmatprep.subr.bf16.mxu0 0
    %558 = vmatpush1.bf16.xpose.msra.mxu0 0
    %559 = vmatprep.mubr.bf16.mxu0 0
    %560 = vmatmul.mubr.bf16.gmra.mrb[0].mxu0 %v522
    %v561 = vpop.f32.mrb[0].mxu0
    %v562 = vadd.f32 %v120, %v561
    %v563 = vpop.f32.mrb[0].mxu0
    %v564 = vpop.f32.mrb[0].mxu0
    %v565 = vadd.f32 %v121, %v564
    %v566 = vpop.f32.mrb[0].mxu0
    %567 = vdwg.mxu0
    %vm568 = vcmask 130048
    %v569 = vsel %vm568, %v412, -inf
    %570 = vmax.xlane.f32.xlu0 %v569
    %v571 = vpop.xlane.xlu0 %570
    %v572 = vsel %vm568, %v415, -inf
    %573 = vmax.xlane.f32.xlu0 %v572
    %v574 = vpop.xlane.xlu0 %573
    %v575 = vsel %vm568, %v462, -inf
    %576 = vmax.xlane.f32.xlu0 %v575
    %v577 = vpop.xlane.xlu0 %576
    %v578 = vsel %vm568, %v465, -inf
    %579 = vmax.xlane.f32.xlu0 %v578
    %v580 = vpop.xlane.xlu0 %579
    %v581 = vsel %vm568, %v512, -inf
    %582 = vmax.xlane.f32.xlu0 %v581
    %v583 = vpop.xlane.xlu0 %582
    %v584 = vsel %vm568, %v515, -inf
    %585 = vmax.xlane.f32.xlu0 %v584
    %v586 = vpop.xlane.xlu0 %585
    %v587 = vsel %vm568, %v562, -inf
    %588 = vmax.xlane.f32.xlu0 %v587
    %v589 = vpop.xlane.xlu0 %588
    %v590 = vsel %vm568, %v565, -inf
    %591 = vmax.xlane.f32.xlu0 %v590
    %v592 = vpop.xlane.xlu0 %591
    %v593 = vsub.f32 %v412, %v571
    %v594 = vsub.f32 %v415, %v574
    %v595 = vsub.f32 %v462, %v577
    %v596 = vsub.f32 %v465, %v580
    %v597 = vsub.f32 %v512, %v583
    %v598 = vsub.f32 %v515, %v586
    %v599 = vsub.f32 %v562, %v589
    %v600 = vsub.f32 %v565, %v592
    %v601 = vmul.f32 %v593, 1.442695
    %v602 = vpow.pop %v601
    %v603 = vmul.f32 %v594, 1.442695
    %v604 = vpow.pop %v603
    %v605 = vmul.f32 %v595, 1.442695
    %v606 = vpow.pop %v605
    %v607 = vmul.f32 %v596, 1.442695
    %v608 = vpow.pop %v607
    %v609 = vmul.f32 %v597, 1.442695
    %v610 = vpow.pop %v609
    %v611 = vmul.f32 %v598, 1.442695
    %v612 = vpow.pop %v611
    %v613 = vmul.f32 %v599, 1.442695
    %v614 = vpow.pop %v613
    %v615 = vmul.f32 %v600, 1.442695
    %v616 = vpow.pop %v615
    %v617 = vsel %vm568, %v602, 0.0
    %618 = vadd.xlane.f32.xlu0 %v617
    %v619 = vpop.xlane.xlu0 %618
    %v620 = vsel %vm568, %v604, 0.0
    %621 = vadd.xlane.f32.xlu0 %v620
    %v622 = vpop.xlane.xlu0 %621
    %v623 = vsel %vm568, %v606, 0.0
    %624 = vadd.xlane.f32.xlu0 %v623
    %v625 = vpop.xlane.xlu0 %624
    %v626 = vsel %vm568, %v608, 0.0
    %627 = vadd.xlane.f32.xlu0 %v626
    %v628 = vpop.xlane.xlu0 %627
    %v629 = vsel %vm568, %v610, 0.0
    %630 = vadd.xlane.f32.xlu0 %v629
    %v631 = vpop.xlane.xlu0 %630
    %v632 = vsel %vm568, %v612, 0.0
    %633 = vadd.xlane.f32.xlu0 %v632
    %v634 = vpop.xlane.xlu0 %633
    %v635 = vsel %vm568, %v614, 0.0
    %636 = vadd.xlane.f32.xlu0 %v635
    %v637 = vpop.xlane.xlu0 %636
    %v638 = vsel %vm568, %v616, 0.0
    %639 = vadd.xlane.f32.xlu0 %v638
    %v640 = vpop.xlane.xlu0 %639
    %v641 = vrcp.pop %v619
    %v642 = vrcp.pop %v622
    %v643 = vrcp.pop %v625
    %v644 = vrcp.pop %v628
    %v645 = vrcp.pop %v631
    %v646 = vrcp.pop %v634
    %v647 = vrcp.pop %v637
    %v648 = vrcp.pop %v640
    %v649 = vmul.f32 %v602, %v641
    %v650 = vmul.f32 %v604, %v642
    %v651 = vmul.f32 %v606, %v643
    %v652 = vmul.f32 %v608, %v644
    %v653 = vmul.f32 %v610, %v645
    %v654 = vmul.f32 %v612, %v646
    %v655 = vmul.f32 %v614, %v647
    %v656 = vmul.f32 %v616, %v648
    %v657 = vpack.c.bf16 %v650, %v649
    %v658 = vpack.c.bf16 %v652, %v651
    %v659 = vpack.c.bf16 %v654, %v653
    %v660 = vpack.c.bf16 %v656, %v655
    %661 = vrot.lane.b32.xlu0 %v363, 112
    %v662 = vpop.permute.xlu0 %661
    %v665 = vsel %vm568, %v657, 0
    %667 = vmatprep.subr.bf16.mxu0 0
    %668 = vmatpush1.bf16.msra.mxu0 %v662
    %669 = vmatprep.subr.bf16.mxu0 0
    %670 = vmatpush1.bf16.msra.mxu0 0
    %671 = vmatprep.subr.bf16.mxu0 0
    %672 = vmatpush1.bf16.msra.mxu0 0
    %673 = vmatprep.subr.bf16.mxu0 0
    %674 = vmatpush1.bf16.msra.mxu0 0
    %675 = vmatprep.subr.bf16.mxu0 0
    %676 = vmatpush1.bf16.msra.mxu0 0
    %677 = vmatprep.subr.bf16.mxu0 0
    %678 = vmatpush1.bf16.msra.mxu0 0
    %679 = vmatprep.subr.bf16.mxu0 0
    %680 = vmatpush1.bf16.msra.mxu0 0
    %681 = vmatprep.subr.bf16.mxu0 0
    %682 = vmatpush1.bf16.msra.mxu0 0
    %683 = vmatprep.subr.bf16.mxu0 0
    %684 = vmatpush1.bf16.msra.mxu0 0
    %685 = vmatprep.subr.bf16.mxu0 0
    %686 = vmatpush1.bf16.msra.mxu0 0
    %687 = vmatprep.subr.bf16.mxu0 0
    %688 = vmatpush1.bf16.msra.mxu0 0
    %689 = vmatprep.subr.bf16.mxu0 0
    %690 = vmatpush1.bf16.msra.mxu0 0
    %691 = vmatprep.subr.bf16.mxu0 0
    %692 = vmatpush1.bf16.msra.mxu0 0
    %693 = vmatprep.subr.bf16.mxu0 0
    %694 = vmatpush1.bf16.msra.mxu0 0
    %695 = vmatprep.subr.bf16.mxu0 0
    %696 = vmatpush1.bf16.msra.mxu0 0
    %697 = vmatprep.subr.bf16.mxu0 0
    %698 = vmatpush1.bf16.msra.mxu0 0
    %699 = vmatprep.mubr.bf16.mxu0 0
    %700 = vmatmul.mubr.bf16.gmra.mrb[0].mxu0 %v665
    %v701 = vpop.f32.mrb[0].mxu0
    %v702 = vadd.f32 0.0, %v701
    %v703 = vpop.f32.mrb[0].mxu0
    %v704 = vpop.f32.mrb[0].mxu0
    %v705 = vadd.f32 0.0, %v704
    %v706 = vpop.f32.mrb[0].mxu0
    %707 = vdwg.mxu0
    %708 = vrot.lane.b32.xlu0 %v364, 112
    %v709 = vpop.permute.xlu0 %708
    %v712 = vsel %vm568, %v658, 0
    %714 = vmatprep.subr.bf16.mxu0 0
    %715 = vmatpush1.bf16.msra.mxu0 %v709
    %716 = vmatprep.subr.bf16.mxu0 0
    %717 = vmatpush1.bf16.msra.mxu0 0
    %718 = vmatprep.subr.bf16.mxu0 0
    %719 = vmatpush1.bf16.msra.mxu0 0
    %720 = vmatprep.subr.bf16.mxu0 0
    %721 = vmatpush1.bf16.msra.mxu0 0
    %722 = vmatprep.subr.bf16.mxu0 0
    %723 = vmatpush1.bf16.msra.mxu0 0
    %724 = vmatprep.subr.bf16.mxu0 0
    %725 = vmatpush1.bf16.msra.mxu0 0
    %726 = vmatprep.subr.bf16.mxu0 0
    %727 = vmatpush1.bf16.msra.mxu0 0
    %728 = vmatprep.subr.bf16.mxu0 0
    %729 = vmatpush1.bf16.msra.mxu0 0
    %730 = vmatprep.subr.bf16.mxu0 0
    %731 = vmatpush1.bf16.msra.mxu0 0
    %732 = vmatprep.subr.bf16.mxu0 0
    %733 = vmatpush1.bf16.msra.mxu0 0
    %734 = vmatprep.subr.bf16.mxu0 0
    %735 = vmatpush1.bf16.msra.mxu0 0
    %736 = vmatprep.subr.bf16.mxu0 0
    %737 = vmatpush1.bf16.msra.mxu0 0
    %738 = vmatprep.subr.bf16.mxu0 0
    %739 = vmatpush1.bf16.msra.mxu0 0
    %740 = vmatprep.subr.bf16.mxu0 0
    %741 = vmatpush1.bf16.msra.mxu0 0
    %742 = vmatprep.subr.bf16.mxu0 0
    %743 = vmatpush1.bf16.msra.mxu0 0
    %744 = vmatprep.subr.bf16.mxu0 0
    %745 = vmatpush1.bf16.msra.mxu0 0
    %746 = vmatprep.mubr.bf16.mxu0 0
    %747 = vmatmul.mubr.bf16.gmra.mrb[0].mxu0 %v712
    %v748 = vpop.f32.mrb[0].mxu0
    %v749 = vadd.f32 0.0, %v748
    %v750 = vpop.f32.mrb[0].mxu0
    %v751 = vpop.f32.mrb[0].mxu0
    %v752 = vadd.f32 0.0, %v751
    %v753 = vpop.f32.mrb[0].mxu0
    %754 = vdwg.mxu0
    %755 = vrot.lane.b32.xlu0 %v365, 112
    %v756 = vpop.permute.xlu0 %755
    %v759 = vsel %vm568, %v659, 0
    %761 = vmatprep.subr.bf16.mxu0 0
    %762 = vmatpush1.bf16.msra.mxu0 %v756
    %763 = vmatprep.subr.bf16.mxu0 0
    %764 = vmatpush1.bf16.msra.mxu0 0
    %765 = vmatprep.subr.bf16.mxu0 0
    %766 = vmatpush1.bf16.msra.mxu0 0
    %767 = vmatprep.subr.bf16.mxu0 0
    %768 = vmatpush1.bf16.msra.mxu0 0
    %769 = vmatprep.subr.bf16.mxu0 0
    %770 = vmatpush1.bf16.msra.mxu0 0
    %771 = vmatprep.subr.bf16.mxu0 0
    %772 = vmatpush1.bf16.msra.mxu0 0
    %773 = vmatprep.subr.bf16.mxu0 0
    %774 = vmatpush1.bf16.msra.mxu0 0
    %775 = vmatprep.subr.bf16.mxu0 0
    %776 = vmatpush1.bf16.msra.mxu0 0
    %777 = vmatprep.subr.bf16.mxu0 0
    %778 = vmatpush1.bf16.msra.mxu0 0
    %779 = vmatprep.subr.bf16.mxu0 0
    %780 = vmatpush1.bf16.msra.mxu0 0
    %781 = vmatprep.subr.bf16.mxu0 0
    %782 = vmatpush1.bf16.msra.mxu0 0
    %783 = vmatprep.subr.bf16.mxu0 0
    %784 = vmatpush1.bf16.msra.mxu0 0
    %785 = vmatprep.subr.bf16.mxu0 0
    %786 = vmatpush1.bf16.msra.mxu0 0
    %787 = vmatprep.subr.bf16.mxu0 0
    %788 = vmatpush1.bf16.msra.mxu0 0
    %789 = vmatprep.subr.bf16.mxu0 0
    %790 = vmatpush1.bf16.msra.mxu0 0
    %791 = vmatprep.subr.bf16.mxu0 0
    %792 = vmatpush1.bf16.msra.mxu0 0
    %793 = vmatprep.mubr.bf16.mxu0 0
    %794 = vmatmul.mubr.bf16.gmra.mrb[0].mxu0 %v759
    %v795 = vpop.f32.mrb[0].mxu0
    %v796 = vadd.f32 0.0, %v795
    %v797 = vpop.f32.mrb[0].mxu0
    %v798 = vpop.f32.mrb[0].mxu0
    %v799 = vadd.f32 0.0, %v798
    %v800 = vpop.f32.mrb[0].mxu0
    %801 = vdwg.mxu0
    %802 = vrot.lane.b32.xlu0 %v366, 112
    %v803 = vpop.permute.xlu0 %802
    %v806 = vsel %vm568, %v660, 0
    %808 = vmatprep.subr.bf16.mxu0 0
    %809 = vmatpush1.bf16.msra.mxu0 %v803
    %810 = vmatprep.subr.bf16.mxu0 0
    %811 = vmatpush1.bf16.msra.mxu0 0
    %812 = vmatprep.subr.bf16.mxu0 0
    %813 = vmatpush1.bf16.msra.mxu0 0
    %814 = vmatprep.subr.bf16.mxu0 0
    %815 = vmatpush1.bf16.msra.mxu0 0
    %816 = vmatprep.subr.bf16.mxu0 0
    %817 = vmatpush1.bf16.msra.mxu0 0
    %818 = vmatprep.subr.bf16.mxu0 0
    %819 = vmatpush1.bf16.msra.mxu0 0
    %820 = vmatprep.subr.bf16.mxu0 0
    %821 = vmatpush1.bf16.msra.mxu0 0
    %822 = vmatprep.subr.bf16.mxu0 0
    %823 = vmatpush1.bf16.msra.mxu0 0
    %824 = vmatprep.subr.bf16.mxu0 0
    %825 = vmatpush1.bf16.msra.mxu0 0
    %826 = vmatprep.subr.bf16.mxu0 0
    %827 = vmatpush1.bf16.msra.mxu0 0
    %828 = vmatprep.subr.bf16.mxu0 0
    %829 = vmatpush1.bf16.msra.mxu0 0
    %830 = vmatprep.subr.bf16.mxu0 0
    %831 = vmatpush1.bf16.msra.mxu0 0
    %832 = vmatprep.subr.bf16.mxu0 0
    %833 = vmatpush1.bf16.msra.mxu0 0
    %834 = vmatprep.subr.bf16.mxu0 0
    %835 = vmatpush1.bf16.msra.mxu0 0
    %836 = vmatprep.subr.bf16.mxu0 0
    %837 = vmatpush1.bf16.msra.mxu0 0
    %838 = vmatprep.subr.bf16.mxu0 0
    %839 = vmatpush1.bf16.msra.mxu0 0
    %840 = vmatprep.mubr.bf16.mxu0 0
    %841 = vmatmul.mubr.bf16.gmra.mrb[0].mxu0 %v806
    %v842 = vpop.f32.mrb[0].mxu0
    %v843 = vadd.f32 0.0, %v842
    %v844 = vpop.f32.mrb[0].mxu0
    %v845 = vpop.f32.mrb[0].mxu0
    %v846 = vadd.f32 0.0, %v845
    %v847 = vpop.f32.mrb[0].mxu0
    %848 = vdwg.mxu0
    %v849 = vpack.c.bf16 %v705, %v702
    %v850 = vpack.c.bf16 %v752, %v749
    %v851 = vpack.c.bf16 %v799, %v796
    %v852 = vpack.c.bf16 %v846, %v843
    %v854 = vsel %vm370, %v849, 0
    %v857 = vsel %vm141, %v97, 0
    %859 = vmatprep.subr.bf16.mxu0 0
    %860 = vmatpush1.bf16.msra.mxu0 %v857
    %861 = vmatprep.subr.bf16.mxu0 0
    %862 = vmatpush1.bf16.msra.mxu0 0
    %863 = vmatprep.subr.bf16.mxu0 0
    %864 = vmatpush1.bf16.msra.mxu0 0
    %865 = vmatprep.subr.bf16.mxu0 0
    %866 = vmatpush1.bf16.msra.mxu0 0
    %867 = vmatprep.subr.bf16.mxu0 0
    %868 = vmatpush1.bf16.msra.mxu0 0
    %869 = vmatprep.subr.bf16.mxu0 0
    %870 = vmatpush1.bf16.msra.mxu0 0
    %871 = vmatprep.subr.bf16.mxu0 0
    %872 = vmatpush1.bf16.msra.mxu0 0
    %873 = vmatprep.subr.bf16.mxu0 0
    %874 = vmatpush1.bf16.msra.mxu0 0
    %875 = vmatprep.subr.bf16.mxu0 0
    %876 = vmatpush1.bf16.msra.mxu0 0
    %877 = vmatprep.subr.bf16.mxu0 0
    %878 = vmatpush1.bf16.msra.mxu0 0
    %879 = vmatprep.subr.bf16.mxu0 0
    %880 = vmatpush1.bf16.msra.mxu0 0
    %881 = vmatprep.subr.bf16.mxu0 0
    %882 = vmatpush1.bf16.msra.mxu0 0
    %883 = vmatprep.subr.bf16.mxu0 0
    %884 = vmatpush1.bf16.msra.mxu0 0
    %885 = vmatprep.subr.bf16.mxu0 0
    %886 = vmatpush1.bf16.msra.mxu0 0
    %887 = vmatprep.subr.bf16.mxu0 0
    %888 = vmatpush1.bf16.msra.mxu0 0
    %889 = vmatprep.subr.bf16.mxu0 0
    %890 = vmatpush1.bf16.msra.mxu0 0
    %891 = vmatprep.mubr.bf16.mxu0 0
    %892 = vmatmul.mubr.bf16.gmra.mrb[0].mxu0 %v854
    %v893 = vpop.f32.mrb[0].mxu0
    %v894 = vadd.f32 0.0, %v893
    %v895 = vpop.f32.mrb[0].mxu0
    %v896 = vpop.f32.mrb[0].mxu0
    %v897 = vadd.f32 0.0, %v896
    %v898 = vpop.f32.mrb[0].mxu0
    %899 = vdwg.mxu0
    %v901 = vsel %vm370, %v850, 0
    %v904 = vsel %vm141, %v98, 0
    %906 = vmatprep.subr.bf16.mxu0 0
    %907 = vmatpush1.bf16.msra.mxu0 %v904
    %908 = vmatprep.subr.bf16.mxu0 0
    %909 = vmatpush1.bf16.msra.mxu0 0
    %910 = vmatprep.subr.bf16.mxu0 0
    %911 = vmatpush1.bf16.msra.mxu0 0
    %912 = vmatprep.subr.bf16.mxu0 0
    %913 = vmatpush1.bf16.msra.mxu0 0
    %914 = vmatprep.subr.bf16.mxu0 0
    %915 = vmatpush1.bf16.msra.mxu0 0
    %916 = vmatprep.subr.bf16.mxu0 0
    %917 = vmatpush1.bf16.msra.mxu0 0
    %918 = vmatprep.subr.bf16.mxu0 0
    %919 = vmatpush1.bf16.msra.mxu0 0
    %920 = vmatprep.subr.bf16.mxu0 0
    %921 = vmatpush1.bf16.msra.mxu0 0
    %922 = vmatprep.subr.bf16.mxu0 0
    %923 = vmatpush1.bf16.msra.mxu0 0
    %924 = vmatprep.subr.bf16.mxu0 0
    %925 = vmatpush1.bf16.msra.mxu0 0
    %926 = vmatprep.subr.bf16.mxu0 0
    %927 = vmatpush1.bf16.msra.mxu0 0
    %928 = vmatprep.subr.bf16.mxu0 0
    %929 = vmatpush1.bf16.msra.mxu0 0
    %930 = vmatprep.subr.bf16.mxu0 0
    %931 = vmatpush1.bf16.msra.mxu0 0
    %932 = vmatprep.subr.bf16.mxu0 0
    %933 = vmatpush1.bf16.msra.mxu0 0
    %934 = vmatprep.subr.bf16.mxu0 0
    %935 = vmatpush1.bf16.msra.mxu0 0
    %936 = vmatprep.subr.bf16.mxu0 0
    %937 = vmatpush1.bf16.msra.mxu0 0
    %938 = vmatprep.mubr.bf16.mxu0 0
    %939 = vmatmul.mubr.bf16.gmra.mrb[0].mxu0 %v901
    %v940 = vpop.f32.mrb[0].mxu0
    %v941 = vadd.f32 0.0, %v940
    %v942 = vpop.f32.mrb[0].mxu0
    %v943 = vpop.f32.mrb[0].mxu0
    %v944 = vadd.f32 0.0, %v943
    %v945 = vpop.f32.mrb[0].mxu0
    %946 = vdwg.mxu0
    %v948 = vsel %vm370, %v851, 0
    %v951 = vsel %vm141, %v99, 0
    %953 = vmatprep.subr.bf16.mxu0 0
    %954 = vmatpush1.bf16.msra.mxu0 %v951
    %955 = vmatprep.subr.bf16.mxu0 0
    %956 = vmatpush1.bf16.msra.mxu0 0
    %957 = vmatprep.subr.bf16.mxu0 0
    %958 = vmatpush1.bf16.msra.mxu0 0
    %959 = vmatprep.subr.bf16.mxu0 0
    %960 = vmatpush1.bf16.msra.mxu0 0
    %961 = vmatprep.subr.bf16.mxu0 0
    %962 = vmatpush1.bf16.msra.mxu0 0
    %963 = vmatprep.subr.bf16.mxu0 0
    %964 = vmatpush1.bf16.msra.mxu0 0
    %965 = vmatprep.subr.bf16.mxu0 0
    %966 = vmatpush1.bf16.msra.mxu0 0
    %967 = vmatprep.subr.bf16.mxu0 0
    %968 = vmatpush1.bf16.msra.mxu0 0
    %969 = vmatprep.subr.bf16.mxu0 0
    %970 = vmatpush1.bf16.msra.mxu0 0
    %971 = vmatprep.subr.bf16.mxu0 0
    %972 = vmatpush1.bf16.msra.mxu0 0
    %973 = vmatprep.subr.bf16.mxu0 0
    %974 = vmatpush1.bf16.msra.mxu0 0
    %975 = vmatprep.subr.bf16.mxu0 0
    %976 = vmatpush1.bf16.msra.mxu0 0
    %977 = vmatprep.subr.bf16.mxu0 0
    %978 = vmatpush1.bf16.msra.mxu0 0
    %979 = vmatprep.subr.bf16.mxu0 0
    %980 = vmatpush1.bf16.msra.mxu0 0
    %981 = vmatprep.subr.bf16.mxu0 0
    %982 = vmatpush1.bf16.msra.mxu0 0
    %983 = vmatprep.subr.bf16.mxu0 0
    %984 = vmatpush1.bf16.msra.mxu0 0
    %985 = vmatprep.mubr.bf16.mxu0 0
    %986 = vmatmul.mubr.bf16.gmra.mrb[0].mxu0 %v948
    %v987 = vpop.f32.mrb[0].mxu0
    %v988 = vadd.f32 0.0, %v987
    %v989 = vpop.f32.mrb[0].mxu0
    %v990 = vpop.f32.mrb[0].mxu0
    %v991 = vadd.f32 0.0, %v990
    %v992 = vpop.f32.mrb[0].mxu0
    %993 = vdwg.mxu0
    %v995 = vsel %vm370, %v852, 0
    %v998 = vsel %vm141, %v100, 0
    %1000 = vmatprep.subr.bf16.mxu0 0
    %1001 = vmatpush1.bf16.msra.mxu0 %v998
    %1002 = vmatprep.subr.bf16.mxu0 0
    %1003 = vmatpush1.bf16.msra.mxu0 0
    %1004 = vmatprep.subr.bf16.mxu0 0
    %1005 = vmatpush1.bf16.msra.mxu0 0
    %1006 = vmatprep.subr.bf16.mxu0 0
    %1007 = vmatpush1.bf16.msra.mxu0 0
    %1008 = vmatprep.subr.bf16.mxu0 0
    %1009 = vmatpush1.bf16.msra.mxu0 0
    %1010 = vmatprep.subr.bf16.mxu0 0
    %1011 = vmatpush1.bf16.msra.mxu0 0
    %1012 = vmatprep.subr.bf16.mxu0 0
    %1013 = vmatpush1.bf16.msra.mxu0 0
    %1014 = vmatprep.subr.bf16.mxu0 0
    %1015 = vmatpush1.bf16.msra.mxu0 0
    %1016 = vmatprep.subr.bf16.mxu0 0
    %1017 = vmatpush1.bf16.msra.mxu0 0
    %1018 = vmatprep.subr.bf16.mxu0 0
    %1019 = vmatpush1.bf16.msra.mxu0 0
    %1020 = vmatprep.subr.bf16.mxu0 0
    %1021 = vmatpush1.bf16.msra.mxu0 0
    %1022 = vmatprep.subr.bf16.mxu0 0
    %1023 = vmatpush1.bf16.msra.mxu0 0
    %1024 = vmatprep.subr.bf16.mxu0 0
    %1025 = vmatpush1.bf16.msra.mxu0 0
    %1026 = vmatprep.subr.bf16.mxu0 0
    %1027 = vmatpush1.bf16.msra.mxu0 0
    %1028 = vmatprep.subr.bf16.mxu0 0
    %1029 = vmatpush1.bf16.msra.mxu0 0
    %1030 = vmatprep.subr.bf16.mxu0 0
    %1031 = vmatpush1.bf16.msra.mxu0 0
    %1032 = vmatprep.mubr.bf16.mxu0 0
    %1033 = vmatmul.mubr.bf16.gmra.mrb[0].mxu0 %v995
    %v1034 = vpop.f32.mrb[0].mxu0
    %v1035 = vadd.f32 0.0, %v1034
    %v1036 = vpop.f32.mrb[0].mxu0
    %v1037 = vpop.f32.mrb[0].mxu0
    %v1038 = vadd.f32 0.0, %v1037
    %v1039 = vpop.f32.mrb[0].mxu0
    %1040 = vdwg.mxu0
    %v1041 = vlaneseq
    %v1042 = vshrl.u32 %v1041, 7
    %v1043 = vsub.s32 0, %v1042
    %v1044 = vrot.slane %v113, %v1043
    %v1045 = vadd.f32 %v1044, %v894
    %v1046 = vadd.f32 %v1044, %v897
    %v1047 = vadd.f32 %v1045, %v941
    %v1048 = vadd.f32 %v1046, %v944
    %v1049 = vadd.f32 %v1047, %v988
    %v1050 = vadd.f32 %v1048, %v991
    %v1051 = vadd.f32 %v1049, %v1035
    %v1052 = vadd.f32 %v1050, %v1038
    %v1053 = vadd.f32 %v74, %v1051
    %v1054 = vadd.f32 %v75, %v1052
    %vm1055 = vcmask 261120
    %v1056 = vsel %vm1055, %v1053, 0.0
    %1057 = vadd.xlane.f32.xlu0 %v1056
    %v1058 = vpop.xlane.xlu0 %1057
    %v1059 = vsel %vm1055, %v1054, 0.0
    %1060 = vadd.xlane.f32.xlu0 %v1059
    %v1061 = vpop.xlane.xlu0 %1060
    %v1062 = vrcp.pop 32.0
    %v1063 = vmul.f32 %v1058, %v1062
    %v1064 = vmul.f32 %v1061, %v1062
    %v1065 = vsub.f32 %v1053, %v1063
    %v1066 = vsub.f32 %v1054, %v1064
    %v1067 = vmul.f32 %v1065, %v1065
    %v1068 = vmul.f32 %v1066, %v1066
    %v1069 = vsel %vm1055, %v1067, 0.0
    %1070 = vadd.xlane.f32.xlu0 %v1069
    %v1071 = vpop.xlane.xlu0 %1070
    %v1072 = vsel %vm1055, %v1068, 0.0
    %1073 = vadd.xlane.f32.xlu0 %v1072
    %v1074 = vpop.xlane.xlu0 %1073
    %v1075 = vmul.f32 %v1071, %v1062
    %v1076 = vmul.f32 %v1074, %v1062
    %v1077 = vadd.f32 %v1075, 1e-05
    %v1078 = vadd.f32 %v1076, 1e-05
    %v1079 = vrsqrt.pop %v1077
    %v1080 = vrsqrt.pop %v1078
    %v1081 = vmul.f32 %v1065, %v1079
    %v1082 = vmul.f32 %v1066, %v1080
    %v1083 = vlaneseq
    %v1084 = vshrl.u32 %v1083, 7
    %v1085 = vsub.s32 0, %v1084
    %v1086 = vrot.slane %v116, %v1085
    %v1087 = vmul.f32 %v1081, %v1086
    %v1088 = vmul.f32 %v1082, %v1086
    %v1089 = vlaneseq
    %v1090 = vshrl.u32 %v1089, 7
    %v1091 = vsub.s32 0, %v1090
    %v1092 = vrot.slane %v117, %v1091
    %v1093 = vadd.f32 %v1087, %v1092
    %v1094 = vadd.f32 %v1088, %v1092
    %v1095 = vpack.c.bf16 %v1094, %v1093
    %v1096 = vlaneseq
    %v1097 = vshrl.u32 %v1096, 7
    %v1098 = vsub.s32 0, %v1097
    %v1099 = vrot.slane %v114, %v1098
    %v1104 = vunpack.c.l.b16 %v101
    %v1105 = vunpack.c.l.b16 %v102
    %v1106 = vunpack.c.l.b16 %v103
    %v1107 = vunpack.c.l.b16 %v104
    %v1108 = vpack.c.b16 %v1105, %v1104
    %v1109 = vpack.c.b16 %v1107, %v1106
    %v1113 = vsel %vm1055, %v1095, 0
    %1115 = vmatprep.subr.bf16.mxu0 0
    %1116 = vmatpush1.bf16.msra.mxu0 %v1108
    %1117 = vmatprep.subr.bf16.mxu0 0
    %1118 = vmatpush1.bf16.msra.mxu0 %v1109
    %1119 = vmatprep.subr.bf16.mxu0 0
    %1120 = vmatpush1.bf16.msra.mxu0 0
    %1121 = vmatprep.subr.bf16.mxu0 0
    %1122 = vmatpush1.bf16.msra.mxu0 0
    %1123 = vmatprep.subr.bf16.mxu0 0
    %1124 = vmatpush1.bf16.msra.mxu0 0
    %1125 = vmatprep.subr.bf16.mxu0 0
    %1126 = vmatpush1.bf16.msra.mxu0 0
    %1127 = vmatprep.subr.bf16.mxu0 0
    %1128 = vmatpush1.bf16.msra.mxu0 0
    %1129 = vmatprep.subr.bf16.mxu0 0
    %1130 = vmatpush1.bf16.msra.mxu0 0
    %1131 = vmatprep.subr.bf16.mxu0 0
    %1132 = vmatpush1.bf16.msra.mxu0 0
    %1133 = vmatprep.subr.bf16.mxu0 0
    %1134 = vmatpush1.bf16.msra.mxu0 0
    %1135 = vmatprep.subr.bf16.mxu0 0
    %1136 = vmatpush1.bf16.msra.mxu0 0
    %1137 = vmatprep.subr.bf16.mxu0 0
    %1138 = vmatpush1.bf16.msra.mxu0 0
    %1139 = vmatprep.subr.bf16.mxu0 0
    %1140 = vmatpush1.bf16.msra.mxu0 0
    %1141 = vmatprep.subr.bf16.mxu0 0
    %1142 = vmatpush1.bf16.msra.mxu0 0
    %1143 = vmatprep.subr.bf16.mxu0 0
    %1144 = vmatpush1.bf16.msra.mxu0 0
    %1145 = vmatprep.subr.bf16.mxu0 0
    %1146 = vmatpush1.bf16.msra.mxu0 0
    %1147 = vmatprep.mubr.bf16.mxu0 0
    %1148 = vmatmul.mubr.bf16.gmra.mrb[0].mxu0 %v1113
    %v1149 = vpop.f32.mrb[0].mxu0
    %v1150 = vadd.f32 %v1099, %v1149
    %v1151 = vpop.f32.mrb[0].mxu0
    %v1152 = vpop.f32.mrb[0].mxu0
    %v1153 = vadd.f32 %v1099, %v1152
    %v1154 = vpop.f32.mrb[0].mxu0
    %1155 = vdwg.mxu0
    %v1156 = vmax.f32 %v1150, 0.0
    %v1157 = vmax.f32 %v1153, 0.0
    %v1158 = vpack.c.bf16 %v1157, %v1156
    %v1159 = vlaneseq
    %v1160 = vshrl.u32 %v1159, 7
    %v1161 = vsub.s32 0, %v1160
    %v1162 = vrot.slane %v115, %v1161
    %v1171 = vunpack.c.l.b16 %v105
    %v1172 = vunpack.c.l.b16 %v106
    %v1173 = vunpack.c.l.b16 %v107
    %v1174 = vunpack.c.l.b16 %v108
    %v1175 = vunpack.c.l.b16 %v109
    %v1176 = vunpack.c.l.b16 %v110
    %v1177 = vunpack.c.l.b16 %v111
    %v1178 = vunpack.c.l.b16 %v112
    %v1179 = vpack.c.b16 %v1172, %v1171
    %v1180 = vpack.c.b16 %v1174, %v1173
    %v1181 = vpack.c.b16 %v1176, %v1175
    %v1182 = vpack.c.b16 %v1178, %v1177
    %vm1187 = vcmask 523264
    %v1189 = vsel %vm1187, %v1158, 0
    %1191 = vmatprep.subr.bf16.mxu0 0
    %1192 = vmatpush1.bf16.msra.mxu0 %v1179
    %1193 = vmatprep.subr.bf16.mxu0 0
    %1194 = vmatpush1.bf16.msra.mxu0 %v1180
    %1195 = vmatprep.subr.bf16.mxu0 0
    %1196 = vmatpush1.bf16.msra.mxu0 %v1181
    %1197 = vmatprep.subr.bf16.mxu0 0
    %1198 = vmatpush1.bf16.msra.mxu0 %v1182
    %1199 = vmatprep.subr.bf16.mxu0 0
    %1200 = vmatpush1.bf16.msra.mxu0 0
    %1201 = vmatprep.subr.bf16.mxu0 0
    %1202 = vmatpush1.bf16.msra.mxu0 0
    %1203 = vmatprep.subr.bf16.mxu0 0
    %1204 = vmatpush1.bf16.msra.mxu0 0
    %1205 = vmatprep.subr.bf16.mxu0 0
    %1206 = vmatpush1.bf16.msra.mxu0 0
    %1207 = vmatprep.subr.bf16.mxu0 0
    %1208 = vmatpush1.bf16.msra.mxu0 0
    %1209 = vmatprep.subr.bf16.mxu0 0
    %1210 = vmatpush1.bf16.msra.mxu0 0
    %1211 = vmatprep.subr.bf16.mxu0 0
    %1212 = vmatpush1.bf16.msra.mxu0 0
    %1213 = vmatprep.subr.bf16.mxu0 0
    %1214 = vmatpush1.bf16.msra.mxu0 0
    %1215 = vmatprep.subr.bf16.mxu0 0
    %1216 = vmatpush1.bf16.msra.mxu0 0
    %1217 = vmatprep.subr.bf16.mxu0 0
    %1218 = vmatpush1.bf16.msra.mxu0 0
    %1219 = vmatprep.subr.bf16.mxu0 0
    %1220 = vmatpush1.bf16.msra.mxu0 0
    %1221 = vmatprep.subr.bf16.mxu0 0
    %1222 = vmatpush1.bf16.msra.mxu0 0
    %1223 = vmatprep.mubr.bf16.mxu0 0
    %1224 = vmatmul.mubr.bf16.gmra.mrb[0].mxu0 %v1189
    %v1225 = vpop.f32.mrb[0].mxu0
    %v1226 = vadd.f32 %v1162, %v1225
    %v1227 = vpop.f32.mrb[0].mxu0
    %v1228 = vpop.f32.mrb[0].mxu0
    %v1229 = vadd.f32 %v1162, %v1228
    %v1230 = vpop.f32.mrb[0].mxu0
    %1231 = vdwg.mxu0
    %v1232 = vadd.f32 %v1093, %v1226
    %v1233 = vadd.f32 %v1094, %v1229
    %v1234 = vsel %vm1055, %v1232, 0.0
    %1235 = vadd.xlane.f32.xlu0 %v1234
    %v1236 = vpop.xlane.xlu0 %1235
    %v1237 = vsel %vm1055, %v1233, 0.0
    %1238 = vadd.xlane.f32.xlu0 %v1237
    %v1239 = vpop.xlane.xlu0 %1238
    %v1240 = vmul.f32 %v1236, %v1062
    %v1241 = vmul.f32 %v1239, %v1062
    %v1242 = vsub.f32 %v1232, %v1240
    %v1243 = vsub.f32 %v1233, %v1241
    %v1244 = vmul.f32 %v1242, %v1242
    %v1245 = vmul.f32 %v1243, %v1243
    %v1246 = vsel %vm1055, %v1244, 0.0
    %1247 = vadd.xlane.f32.xlu0 %v1246
    %v1248 = vpop.xlane.xlu0 %1247
    %v1249 = vsel %vm1055, %v1245, 0.0
    %1250 = vadd.xlane.f32.xlu0 %v1249
    %v1251 = vpop.xlane.xlu0 %1250
    %v1252 = vmul.f32 %v1248, %v1062
    %v1253 = vmul.f32 %v1251, %v1062
    %v1254 = vadd.f32 %v1252, 1e-05
    %v1255 = vadd.f32 %v1253, 1e-05
    %v1256 = vrsqrt.pop %v1254
    %v1257 = vrsqrt.pop %v1255
    %v1258 = vmul.f32 %v1242, %v1256
    %v1259 = vmul.f32 %v1243, %v1257
    %v1260 = vlaneseq
    %v1261 = vshrl.u32 %v1260, 7
    %v1262 = vsub.s32 0, %v1261
    %v1263 = vrot.slane %v118, %v1262
    %v1264 = vmul.f32 %v1258, %v1263
    %v1265 = vmul.f32 %v1259, %v1263
    %v1266 = vlaneseq
    %v1267 = vshrl.u32 %v1266, 7
    %v1268 = vsub.s32 0, %v1267
    %v1269 = vrot.slane %v119, %v1268
    %v1270 = vadd.f32 %v1264, %v1269
    %v1271 = vadd.f32 %v1265, %v1269
    %1272 = vst.msk [vmem:[#allocation10] sm:$0xff] %vm1055, %v1270
    %1273 = vst.msk [vmem:[#allocation10 + $0x8] sm:$0xff] %vm1055, %v1271
    // Predicated region
    $region34: #{tpu_custom_call.1} parent=1 // pred_check
      _
    $region35: #{tpu_custom_call.1} parent=1 // pred_check_branch
      %1275 = sbr.rel (0) target = $region37
    $region36: #{tpu_custom_call.1} parent=1 // pred_region
      %s1277 = ssub.s32 256, 256
      %1278 = vsyncadd [#allocation4], %s1277
      %s1279 = sshll.u32 [#allocation10], 4
      %s1280 = int_to_ptr.vmem [resolvable:$true] %s1279
      %1285 = dma.vmem_to_hbm [thread:$0]  %s1280, 256, %s4, [#allocation4], 128, 128, 8
    $region37: #{tpu_custom_call.1} parent=1 // pred_fallthru
      _
    // Predicated region
    $region38: #{tpu_custom_call.1} parent=1 // pred_check
      _
    $region39: #{tpu_custom_call.1} parent=1 // pred_check_branch
      %1287 = sbr.rel (0) target = $region41
    $region40: #{tpu_custom_call.1} parent=1 // pred_region
      %1288 = dma.done [#allocation4], 256
    $region41: #{tpu_custom_call.1} parent=1 // pred_fallthru
      _
    %1289 = vsyncpa [#allocation3], 1
    %1290 = vsyncpa [#allocation6], 1
    %1291 = vsyncpa [#allocation9], 1
    %1292 = vsyncpa [#allocation4], 1

</llo_original>
